<compile_context>
chip_gen: v6e
topology: v6e:2x2x1
jax: 0.10.0
libtpu: 0.0.40
codegen_flags: <defaults>
</compile_context>

<pallas_src>
import functools

import jax
import jax.numpy as jnp
from jax.experimental import pallas as pl
from jax.experimental.pallas import tpu as pltpu


def gru_fc_kernel(x_ref, w_h_ref, b_hn_ref, w_fc_ref, b_fc_ref, out_ref, h_ref,
                  *, chunk, batch_blk, gate_pad, seq_len, unroll):
    """One (batch_block, time_chunk) grid step of the GRU recurrence + final fc.

    x_ref:   (chunk, batch_blk, 3G) bf16 -- pre-projected inputs (emb_proj gather), gate bands of G lanes.
    w_h_ref: (G, 3G) bf16 fused hidden->gate weights (zero-padded rows/cols).
    b_hn_ref:(1, G)  f32 bias of the n-gate hidden path (r-scaled, cannot be folded).
    w_fc_ref:(G, O_pad) bf16, b_fc_ref:(1, O_pad) f32.
    out_ref: (batch_blk, O_pad) f32 -- written only on the last time chunk.
    h_ref:   (batch_blk, G) f32 VMEM scratch carrying the hidden state across time chunks.
    """
    G = gate_pad
    c = pl.program_id(1)

    @pl.when(c == 0)
    def _():
        h_ref[...] = jnp.zeros_like(h_ref)       # torch _init_hidden: zeros

    # Loop-invariant loads / broadcasts hoisted off the serial chain.
    w_h = w_h_ref[...]                                           # (G, 3G) bf16
    b_hn = jnp.broadcast_to(b_hn_ref[...], (batch_blk, G))       # (B, G) f32

    t0 = c * chunk

    def step(t, h):
        xp = x_ref[t].astype(jnp.float32)                        # (B, 3G), gate bands lane-aligned
        hp = jnp.dot(h.astype(jnp.bfloat16), w_h,
                     preferred_element_type=jnp.float32)         # (B, 3G)
        # PyTorch GRU semantics; b_ir/b_iz/b_in and b_hr/b_hz already folded into xp at pack time.
        r = jax.nn.sigmoid(xp[:, :G] + hp[:, :G])
        z = jax.nn.sigmoid(xp[:, G:2 * G] + hp[:, G:2 * G])
        n = jnp.tanh(xp[:, 2 * G:] + r * (hp[:, 2 * G:] + b_hn))
        h_new = (1.0 - z) * n + z * h
        # Mask timesteps beyond the true sequence length (S padded up to a chunk multiple).
        valid = ((t0 + t) < seq_len).astype(jnp.float32)
        return h + valid * (h_new - h)

    h = jax.lax.fori_loop(0, chunk, step, h_ref[...], unroll=unroll)
    h_ref[...] = h

    @pl.when(c == pl.num_programs(1) - 1)
    def _():
        out_ref[...] = (
            jnp.dot(h.astype(jnp.bfloat16), w_fc_ref[...],
                    preferred_element_type=jnp.float32)
            + b_fc_ref[...]).astype(out_ref.dtype)


def pack_params(raw):
    """Pack torch-like raw f32 params into kernel operands (fused / padded / bf16)."""
    H = raw["w_ir"].shape[0]
    O = raw["w_fc"].shape[1]
    G = ((H + 127) // 128) * 128          # lane-dense per-gate band
    O_pad = ((O + 127) // 128) * 128      # lane-dense fc output

    emb_b = raw["emb"].astype(jnp.bfloat16)
    w_i = jnp.concatenate([raw["w_ir"], raw["w_iz"], raw["w_in"]],
                          axis=1).astype(jnp.bfloat16)                       # (H, 3H)
    # b_hr / b_hz are h-independent additive terms -> fold into the input-side bias.
    # Only b_hn must stay on the hidden path (it is scaled by r).
    b_i = jnp.concatenate([raw["b_ir"] + raw["b_hr"],
                           raw["b_iz"] + raw["b_hz"],
                           raw["b_in"]], axis=1)                             # (1, 3H) f32

    # Fused embedding + input projection: a row gather of this table == x_t @ W_i + biases.
    emb_proj = jnp.dot(emb_b, w_i, preferred_element_type=jnp.float32) + b_i  # (V, 3H) f32

    def pad_gates(a):  # (rows, 3H) -> (rows, 3G): each gate in its own 128-lane-aligned band
        rows = a.shape[0]
        out = jnp.zeros((rows, 3 * G), a.dtype)
        for g in range(3):
            out = out.at[:, g * G:g * G + H].set(a[:, g * H:(g + 1) * H])
        return out

    w_h = jnp.concatenate([raw["w_hr"], raw["w_hz"], raw["w_hn"]], axis=1)    # (H, 3H) f32
    w_h_pad = jnp.zeros((G, 3 * G), jnp.bfloat16).at[:H, :].set(
        pad_gates(w_h).astype(jnp.bfloat16))
    emb_proj_pad = pad_gates(emb_proj).astype(jnp.bfloat16)                   # bf16 storage

    b_hn_pad = jnp.zeros((1, G), jnp.float32).at[:, :H].set(raw["b_hn"])
    w_fc_pad = jnp.zeros((G, O_pad), jnp.bfloat16).at[:H, :O].set(
        raw["w_fc"].astype(jnp.bfloat16))
    b_fc_pad = jnp.zeros((1, O_pad), jnp.float32).at[:, :O].set(raw["b_fc"])

    return {"emb_proj": emb_proj_pad, "w_h": w_h_pad, "b_hn": b_hn_pad,
            "w_fc": w_fc_pad, "b_fc": b_fc_pad,
            "hidden": H, "gate_pad": G, "out_size": O, "out_pad": O_pad}


def rnn_classifier_forward(token_ids, packed, *, chunk=None):
    """token_ids: (batch, seq) int32. Returns (n_layers=1, batch, output_size) float32."""
    B, S = token_ids.shape
    G = packed["gate_pad"]
    O = packed["out_size"]
    O_pad = packed["out_pad"]

    # Sublane-dense batch; split across a "parallel" grid axis (two TC on v7x) once >= 16 rows.
    B_pad = ((max(B, 8) + 7) // 8) * 8
    if B_pad >= 16:
        B_blk = ((B_pad // 2 + 7) // 8) * 8
        B_pad = 2 * B_blk
    else:
        B_blk = B_pad
    nb = B_pad // B_blk

    if chunk is None:
        chunk = min(S, 32)
    nt = pl.cdiv(S, chunk)
    S_pad = nt * chunk

    # Glue (plain JAX): transpose to time-major, pad, and gather rows of the fused projection table.
    ids = jnp.zeros((S_pad, B_pad), jnp.int32).at[:S, :B].set(token_ids.T)
    xproj = jnp.take(packed["emb_proj"], ids, axis=0)        # (S_pad, B_pad, 3G) bf16
    # TODO(synk): for large vocab / long seq, gather in-kernel from a scalar-prefetched id table
    #             + VMEM emb_proj to avoid this gathered tensor's HBM round trip.

    kernel = functools.partial(
        gru_fc_kernel, chunk=chunk, batch_blk=B_blk, gate_pad=G, seq_len=S,
        unroll=min(chunk, 8))

    # VMEM budget: double-buffered streamed block + resident weights + output + h scratch.
    bytes_needed = (
        2 * chunk * B_blk * 3 * G * 2            # xproj blocks (bf16, double-buffered)
        + 2 * (G * 3 * G + G * O_pad) * 2        # w_h + w_fc (bf16)
        + 2 * (G + O_pad) * 4                    # biases (f32)
        + 2 * B_blk * O_pad * 4                  # output block (f32)
        + B_blk * G * 4)                         # h scratch (f32)
    vmem_limit = int(min(max(2 * bytes_needed, 4 << 20), 64 << 20))

    out_pad = pl.pallas_call(
        kernel,
        out_shape=jax.ShapeDtypeStruct((B_pad, O_pad), jnp.float32),
        grid=(nb, nt),
        in_specs=[
            pl.BlockSpec((chunk, B_blk, 3 * G), lambda b, c: (c, b, 0)),   # streamed xproj
            pl.BlockSpec((G, 3 * G), lambda b, c: (0, 0)),                 # w_h (resident)
            pl.BlockSpec((1, G), lambda b, c: (0, 0)),                     # b_hn
            pl.BlockSpec((G, O_pad), lambda b, c: (0, 0)),                 # w_fc
            pl.BlockSpec((1, O_pad), lambda b, c: (0, 0)),                 # b_fc
        ],
        out_specs=pl.BlockSpec((B_blk, O_pad), lambda b, c: (b, 0)),
        scratch_shapes=[pltpu.VMEM((B_blk, G), jnp.float32)],              # hidden-state carry
        compiler_params=pltpu.CompilerParams(
            dimension_semantics=("parallel", "arbitrary"),
            vmem_limit_bytes=vmem_limit),
    )(xproj, packed["w_h"], packed["b_hn"], packed["w_fc"], packed["b_fc"])

    # Slice off layout padding; (n_layers=1, batch, output_size) like torch's fc(hidden).
    return out_pad[:B, :O][None]


def init_params(key, input_size, hidden_size, output_size):
    """Raw torch-like parameters (all f32): nn.Embedding / nn.GRU(per-gate) / nn.Linear."""
    ks = jax.random.split(key, 15)
    H, O = hidden_size, output_size
    s = 0.1
    g = lambda k, shape: jax.random.normal(k, shape, jnp.float32) * s
    return {
        "emb": g(ks[0], (input_size, H)),
        "w_ir": g(ks[1], (H, H)), "w_iz": g(ks[2], (H, H)), "w_in": g(ks[3], (H, H)),
        "w_hr": g(ks[4], (H, H)), "w_hz": g(ks[5], (H, H)), "w_hn": g(ks[6], (H, H)),
        "b_ir": g(ks[7], (1, H)), "b_iz": g(ks[8], (1, H)), "b_in": g(ks[9], (1, H)),
        "b_hr": g(ks[10], (1, H)), "b_hz": g(ks[11], (1, H)), "b_hn": g(ks[12], (1, H)),
        "w_fc": g(ks[13], (H, O)), "b_fc": g(ks[14], (1, O)),
    }


def reference_forward(token_ids, raw):
    """Pure-JAX f32 reference mirroring torch nn.GRU + nn.Linear semantics exactly."""
    x = raw["emb"][token_ids.T]                       # (S, B, H) f32, time-major
    B = token_ids.shape[0]
    H = raw["w_ir"].shape[0]
    h = jnp.zeros((B, H), jnp.float32)
    for t in range(x.shape[0]):
        xt = x[t]
        r = jax.nn.sigmoid(xt @ raw["w_ir"] + raw["b_ir"] + h @ raw["w_hr"] + raw["b_hr"])
        z = jax.nn.sigmoid(xt @ raw["w_iz"] + raw["b_iz"] + h @ raw["w_hz"] + raw["b_hz"])
        n = jnp.tanh(xt @ raw["w_in"] + raw["b_in"] + r * (h @ raw["w_hn"] + raw["b_hn"]))
        h = (1.0 - z) * n + z * h
    out = h @ raw["w_fc"] + raw["b_fc"]
    return out[None]                                  # (1, B, O)


if __name__ == "__main__":
    # Small shapes consistent with the module: vocab=16, hidden=32, output=8, batch=4, seq=8
    INPUT_SIZE, HIDDEN_SIZE, OUTPUT_SIZE = 16, 32, 8
    BATCH, SEQ = 4, 8

    key = jax.random.PRNGKey(0)
    k_param, k_data = jax.random.split(key)
    raw_params = init_params(k_param, INPUT_SIZE, HIDDEN_SIZE, OUTPUT_SIZE)
    packed_params = pack_params(raw_params)
    token_ids = jax.random.randint(k_data, (BATCH, SEQ), 0, INPUT_SIZE, dtype=jnp.int32)

    out = jax.block_until_ready(rnn_classifier_forward(token_ids, packed_params))
    ref = reference_forward(token_ids, raw_params)

    assert out.shape == (1, BATCH, OUTPUT_SIZE), out.shape
    # Kernel uses bf16 weights/activations with f32 accumulation -> compare against the f32
    # torch-semantics reference at a bf16-appropriate tolerance.
    assert jnp.allclose(out, ref, atol=5e-3, rtol=5e-3), (out, ref)

    print("KERNEL_OK")
</pallas_src>

<mosaic_0001>
module attributes {stable_mosaic.version = 11 : i64} {
  func.func @gru_fc_kernel(%arg0: i32, %arg1: i32, %arg2: memref<8x8x384xbf16, #tpu.memory_space<vmem>>, %arg3: memref<128x384xbf16, #tpu.memory_space<vmem>>, %arg4: memref<1x128xf32, #tpu.memory_space<vmem>>, %arg5: memref<128x128xbf16, #tpu.memory_space<vmem>>, %arg6: memref<1x128xf32, #tpu.memory_space<vmem>>, %arg7: memref<8x128xf32, #tpu.memory_space<vmem>>, %arg8: memref<8x128xf32, #tpu.memory_space<vmem>>) attributes {dimension_semantics = [#tpu.dimension_semantics<parallel>, #tpu.dimension_semantics<arbitrary>], iteration_bounds = array<i64: 1, 1>, scalar_prefetch = 0 : i64, scratch_operands = 1 : i64, tpu.core_type = #tpu.core_type<tc>, window_params = [{transform_indices = @transform_0, window_bounds = array<i64: 8, 8, 384>}, {pipeline_mode = #tpu.pipeline_mode<synchronous>, transform_indices = @transform_1, window_bounds = array<i64: 128, 384>}, {pipeline_mode = #tpu.pipeline_mode<synchronous>, transform_indices = @transform_2, window_bounds = array<i64: 1, 128>}, {pipeline_mode = #tpu.pipeline_mode<synchronous>, transform_indices = @transform_3, window_bounds = array<i64: 128, 128>}, {pipeline_mode = #tpu.pipeline_mode<synchronous>, transform_indices = @transform_4, window_bounds = array<i64: 1, 128>}, {transform_indices = @transform_5, window_bounds = array<i64: 8, 128>}]} {
    %c0_i32 = arith.constant 0 : i32
    %0 = arith.cmpi eq, %arg1, %c0_i32 : i32
    %1 = arith.extui %0 : i1 to i32
    %c0_i32_0 = arith.constant 0 : i32
    %2 = arith.cmpi ne, %1, %c0_i32_0 : i32
    scf.if %2 {
      %cst_67 = arith.constant 0.000000e+00 : f32
      %341 = vector.broadcast %cst_67 : f32 to vector<8x128xf32>
      %c0_68 = arith.constant 0 : index
      %c0_69 = arith.constant 0 : index
      %342 = vector.load %arg8[%c0_68, %c0_69] : memref<8x128xf32, #tpu.memory_space<vmem>>, vector<8x128xf32>
      tpu.vector_store %arg8[%c0_68, %c0_69], %341 {strides = array<i32>} : memref<8x128xf32, #tpu.memory_space<vmem>>, vector<8x128xf32>,
    } else {
    }
    %c0 = arith.constant 0 : index
    %c0_1 = arith.constant 0 : index
    %3 = vector.load %arg3[%c0, %c0_1] : memref<128x384xbf16, #tpu.memory_space<vmem>>, vector<128x384xbf16>
    %c0_2 = arith.constant 0 : index
    %c0_3 = arith.constant 0 : index
    %4 = vector.load %arg4[%c0_2, %c0_3] : memref<1x128xf32, #tpu.memory_space<vmem>>, vector<1x128xf32>
    %5 = vector.shape_cast %4 : vector<1x128xf32> to vector<1x128xf32>
    %6 = vector.broadcast %5 : vector<1x128xf32> to vector<8x128xf32>
    %c8_i32 = arith.constant 8 : i32
    %7 = arith.muli %arg1, %c8_i32 : i32
    %c0_4 = arith.constant 0 : index
    %c0_5 = arith.constant 0 : index
    %8 = vector.load %arg8[%c0_4, %c0_5] : memref<8x128xf32, #tpu.memory_space<vmem>>, vector<8x128xf32>
    %c0_i32_6 = arith.constant 0 : i32
    %9 = arith.index_cast %c0_i32_6 : i32 to index
    %c0_7 = arith.constant 0 : index
    %c0_8 = arith.constant 0 : index
    %10 = vector.load %arg2[%9, %c0_7, %c0_8] : memref<8x8x384xbf16, #tpu.memory_space<vmem>>, vector<1x8x384xbf16>
    %11 = vector.shape_cast %10 : vector<1x8x384xbf16> to vector<8x384xbf16>
    %12 = arith.extf %11 : vector<8x384xbf16> to vector<8x384xf32>
    %13 = arith.truncf %8 : vector<8x128xf32> to vector<8x128xbf16>
    %cst = arith.constant dense<0.000000e+00> : vector<8x384xf32>
    %14 = tpu.matmul %13, %3, %cst {dimension_numbers = #tpu.dot_dimension_numbers<[1], [0], [0], [1], [0, 0, 1, 1], [], []>} : vector<8x128xbf16>, vector<128x384xbf16>, vector<8x384xf32> -> vector<8x384xf32>
    %15 = vector.extract_strided_slice %12 {offsets = [0, 0], sizes = [8, 128], strides = [1, 1]} : vector<8x384xf32> to vector<8x128xf32>
    %16 = vector.extract_strided_slice %14 {offsets = [0, 0], sizes = [8, 128], strides = [1, 1]} : vector<8x384xf32> to vector<8x128xf32>
    %17 = arith.addf %15, %16 : vector<8x128xf32>
    %18 = arith.negf %17 : vector<8x128xf32>
    %19 = math.exp %18 : vector<8x128xf32>
    %cst_9 = arith.constant 1.000000e+00 : f32
    %20 = vector.broadcast %cst_9 : f32 to vector<8x128xf32>
    %21 = arith.addf %20, %19 : vector<8x128xf32>
    %22 = arith.divf %20, %21 : vector<8x128xf32>
    %23 = vector.extract_strided_slice %12 {offsets = [0, 128], sizes = [8, 128], strides = [1, 1]} : vector<8x384xf32> to vector<8x128xf32>
    %24 = vector.extract_strided_slice %14 {offsets = [0, 128], sizes = [8, 128], strides = [1, 1]} : vector<8x384xf32> to vector<8x128xf32>
    %25 = arith.addf %23, %24 : vector<8x128xf32>
    %26 = arith.negf %25 : vector<8x128xf32>
    %27 = math.exp %26 : vector<8x128xf32>
    %cst_10 = arith.constant 1.000000e+00 : f32
    %28 = vector.broadcast %cst_10 : f32 to vector<8x128xf32>
    %29 = arith.addf %28, %27 : vector<8x128xf32>
    %30 = arith.divf %28, %29 : vector<8x128xf32>
    %31 = vector.extract_strided_slice %12 {offsets = [0, 256], sizes = [8, 128], strides = [1, 1]} : vector<8x384xf32> to vector<8x128xf32>
    %32 = vector.extract_strided_slice %14 {offsets = [0, 256], sizes = [8, 128], strides = [1, 1]} : vector<8x384xf32> to vector<8x128xf32>
    %33 = arith.addf %32, %6 : vector<8x128xf32>
    %34 = arith.mulf %22, %33 : vector<8x128xf32>
    %35 = arith.addf %31, %34 : vector<8x128xf32>
    %36 = math.tanh %35 : vector<8x128xf32>
    %cst_11 = arith.constant 1.000000e+00 : f32
    %37 = vector.broadcast %cst_11 : f32 to vector<8x128xf32>
    %38 = arith.subf %37, %30 : vector<8x128xf32>
    %39 = arith.mulf %38, %36 : vector<8x128xf32>
    %40 = arith.mulf %30, %8 : vector<8x128xf32>
    %41 = arith.addf %39, %40 : vector<8x128xf32>
    %42 = arith.addi %7, %c0_i32_6 : i32
    %c8_i32_12 = arith.constant 8 : i32
    %43 = arith.cmpi slt, %42, %c8_i32_12 : i32
    %44 = arith.extui %43 : i1 to i32
    %45 = arith.sitofp %44 : i32 to f32
    %46 = arith.subf %41, %8 : vector<8x128xf32>
    %47 = vector.broadcast %45 : f32 to vector<8x128xf32>
    %48 = arith.mulf %47, %46 : vector<8x128xf32>
    %49 = arith.addf %8, %48 : vector<8x128xf32>
    %c1_i32 = arith.constant 1 : i32
    %50 = arith.index_cast %c1_i32 : i32 to index
    %c0_13 = arith.constant 0 : index
    %c0_14 = arith.constant 0 : index
    %51 = vector.load %arg2[%50, %c0_13, %c0_14] : memref<8x8x384xbf16, #tpu.memory_space<vmem>>, vector<1x8x384xbf16>
    %52 = vector.shape_cast %51 : vector<1x8x384xbf16> to vector<8x384xbf16>
    %53 = arith.extf %52 : vector<8x384xbf16> to vector<8x384xf32>
    %54 = arith.truncf %49 : vector<8x128xf32> to vector<8x128xbf16>
    %cst_15 = arith.constant dense<0.000000e+00> : vector<8x384xf32>
    %55 = tpu.matmul %54, %3, %cst_15 {dimension_numbers = #tpu.dot_dimension_numbers<[1], [0], [0], [1], [0, 0, 1, 1], [], []>} : vector<8x128xbf16>, vector<128x384xbf16>, vector<8x384xf32> -> vector<8x384xf32>
    %56 = vector.extract_strided_slice %53 {offsets = [0, 0], sizes = [8, 128], strides = [1, 1]} : vector<8x384xf32> to vector<8x128xf32>
    %57 = vector.extract_strided_slice %55 {offsets = [0, 0], sizes = [8, 128], strides = [1, 1]} : vector<8x384xf32> to vector<8x128xf32>
    %58 = arith.addf %56, %57 : vector<8x128xf32>
    %59 = arith.negf %58 : vector<8x128xf32>
    %60 = math.exp %59 : vector<8x128xf32>
    %cst_16 = arith.constant 1.000000e+00 : f32
    %61 = vector.broadcast %cst_16 : f32 to vector<8x128xf32>
    %62 = arith.addf %61, %60 : vector<8x128xf32>
    %63 = arith.divf %61, %62 : vector<8x128xf32>
    %64 = vector.extract_strided_slice %53 {offsets = [0, 128], sizes = [8, 128], strides = [1, 1]} : vector<8x384xf32> to vector<8x128xf32>
    %65 = vector.extract_strided_slice %55 {offsets = [0, 128], sizes = [8, 128], strides = [1, 1]} : vector<8x384xf32> to vector<8x128xf32>
    %66 = arith.addf %64, %65 : vector<8x128xf32>
    %67 = arith.negf %66 : vector<8x128xf32>
    %68 = math.exp %67 : vector<8x128xf32>
    %cst_17 = arith.constant 1.000000e+00 : f32
    %69 = vector.broadcast %cst_17 : f32 to vector<8x128xf32>
    %70 = arith.addf %69, %68 : vector<8x128xf32>
    %71 = arith.divf %69, %70 : vector<8x128xf32>
    %72 = vector.extract_strided_slice %53 {offsets = [0, 256], sizes = [8, 128], strides = [1, 1]} : vector<8x384xf32> to vector<8x128xf32>
    %73 = vector.extract_strided_slice %55 {offsets = [0, 256], sizes = [8, 128], strides = [1, 1]} : vector<8x384xf32> to vector<8x128xf32>
    %74 = arith.addf %73, %6 : vector<8x128xf32>
    %75 = arith.mulf %63, %74 : vector<8x128xf32>
    %76 = arith.addf %72, %75 : vector<8x128xf32>
    %77 = math.tanh %76 : vector<8x128xf32>
    %cst_18 = arith.constant 1.000000e+00 : f32
    %78 = vector.broadcast %cst_18 : f32 to vector<8x128xf32>
    %79 = arith.subf %78, %71 : vector<8x128xf32>
    %80 = arith.mulf %79, %77 : vector<8x128xf32>
    %81 = arith.mulf %71, %49 : vector<8x128xf32>
    %82 = arith.addf %80, %81 : vector<8x128xf32>
    %83 = arith.addi %7, %c1_i32 : i32
    %c8_i32_19 = arith.constant 8 : i32
    %84 = arith.cmpi slt, %83, %c8_i32_19 : i32
    %85 = arith.extui %84 : i1 to i32
    %86 = arith.sitofp %85 : i32 to f32
    %87 = arith.subf %82, %49 : vector<8x128xf32>
    %88 = vector.broadcast %86 : f32 to vector<8x128xf32>
    %89 = arith.mulf %88, %87 : vector<8x128xf32>
    %90 = arith.addf %49, %89 : vector<8x128xf32>
    %c2_i32 = arith.constant 2 : i32
    %91 = arith.index_cast %c2_i32 : i32 to index
    %c0_20 = arith.constant 0 : index
    %c0_21 = arith.constant 0 : index
    %92 = vector.load %arg2[%91, %c0_20, %c0_21] : memref<8x8x384xbf16, #tpu.memory_space<vmem>>, vector<1x8x384xbf16>
    %93 = vector.shape_cast %92 : vector<1x8x384xbf16> to vector<8x384xbf16>
    %94 = arith.extf %93 : vector<8x384xbf16> to vector<8x384xf32>
    %95 = arith.truncf %90 : vector<8x128xf32> to vector<8x128xbf16>
    %cst_22 = arith.constant dense<0.000000e+00> : vector<8x384xf32>
    %96 = tpu.matmul %95, %3, %cst_22 {dimension_numbers = #tpu.dot_dimension_numbers<[1], [0], [0], [1], [0, 0, 1, 1], [], []>} : vector<8x128xbf16>, vector<128x384xbf16>, vector<8x384xf32> -> vector<8x384xf32>
    %97 = vector.extract_strided_slice %94 {offsets = [0, 0], sizes = [8, 128], strides = [1, 1]} : vector<8x384xf32> to vector<8x128xf32>
    %98 = vector.extract_strided_slice %96 {offsets = [0, 0], sizes = [8, 128], strides = [1, 1]} : vector<8x384xf32> to vector<8x128xf32>
    %99 = arith.addf %97, %98 : vector<8x128xf32>
    %100 = arith.negf %99 : vector<8x128xf32>
    %101 = math.exp %100 : vector<8x128xf32>
    %cst_23 = arith.constant 1.000000e+00 : f32
    %102 = vector.broadcast %cst_23 : f32 to vector<8x128xf32>
    %103 = arith.addf %102, %101 : vector<8x128xf32>
    %104 = arith.divf %102, %103 : vector<8x128xf32>
    %105 = vector.extract_strided_slice %94 {offsets = [0, 128], sizes = [8, 128], strides = [1, 1]} : vector<8x384xf32> to vector<8x128xf32>
    %106 = vector.extract_strided_slice %96 {offsets = [0, 128], sizes = [8, 128], strides = [1, 1]} : vector<8x384xf32> to vector<8x128xf32>
    %107 = arith.addf %105, %106 : vector<8x128xf32>
    %108 = arith.negf %107 : vector<8x128xf32>
    %109 = math.exp %108 : vector<8x128xf32>
    %cst_24 = arith.constant 1.000000e+00 : f32
    %110 = vector.broadcast %cst_24 : f32 to vector<8x128xf32>
    %111 = arith.addf %110, %109 : vector<8x128xf32>
    %112 = arith.divf %110, %111 : vector<8x128xf32>
    %113 = vector.extract_strided_slice %94 {offsets = [0, 256], sizes = [8, 128], strides = [1, 1]} : vector<8x384xf32> to vector<8x128xf32>
    %114 = vector.extract_strided_slice %96 {offsets = [0, 256], sizes = [8, 128], strides = [1, 1]} : vector<8x384xf32> to vector<8x128xf32>
    %115 = arith.addf %114, %6 : vector<8x128xf32>
    %116 = arith.mulf %104, %115 : vector<8x128xf32>
    %117 = arith.addf %113, %116 : vector<8x128xf32>
    %118 = math.tanh %117 : vector<8x128xf32>
    %cst_25 = arith.constant 1.000000e+00 : f32
    %119 = vector.broadcast %cst_25 : f32 to vector<8x128xf32>
    %120 = arith.subf %119, %112 : vector<8x128xf32>
    %121 = arith.mulf %120, %118 : vector<8x128xf32>
    %122 = arith.mulf %112, %90 : vector<8x128xf32>
    %123 = arith.addf %121, %122 : vector<8x128xf32>
    %124 = arith.addi %7, %c2_i32 : i32
    %c8_i32_26 = arith.constant 8 : i32
    %125 = arith.cmpi slt, %124, %c8_i32_26 : i32
    %126 = arith.extui %125 : i1 to i32
    %127 = arith.sitofp %126 : i32 to f32
    %128 = arith.subf %123, %90 : vector<8x128xf32>
    %129 = vector.broadcast %127 : f32 to vector<8x128xf32>
    %130 = arith.mulf %129, %128 : vector<8x128xf32>
    %131 = arith.addf %90, %130 : vector<8x128xf32>
    %c3_i32 = arith.constant 3 : i32
    %132 = arith.index_cast %c3_i32 : i32 to index
    %c0_27 = arith.constant 0 : index
    %c0_28 = arith.constant 0 : index
    %133 = vector.load %arg2[%132, %c0_27, %c0_28] : memref<8x8x384xbf16, #tpu.memory_space<vmem>>, vector<1x8x384xbf16>
    %134 = vector.shape_cast %133 : vector<1x8x384xbf16> to vector<8x384xbf16>
    %135 = arith.extf %134 : vector<8x384xbf16> to vector<8x384xf32>
    %136 = arith.truncf %131 : vector<8x128xf32> to vector<8x128xbf16>
    %cst_29 = arith.constant dense<0.000000e+00> : vector<8x384xf32>
    %137 = tpu.matmul %136, %3, %cst_29 {dimension_numbers = #tpu.dot_dimension_numbers<[1], [0], [0], [1], [0, 0, 1, 1], [], []>} : vector<8x128xbf16>, vector<128x384xbf16>, vector<8x384xf32> -> vector<8x384xf32>
    %138 = vector.extract_strided_slice %135 {offsets = [0, 0], sizes = [8, 128], strides = [1, 1]} : vector<8x384xf32> to vector<8x128xf32>
    %139 = vector.extract_strided_slice %137 {offsets = [0, 0], sizes = [8, 128], strides = [1, 1]} : vector<8x384xf32> to vector<8x128xf32>
    %140 = arith.addf %138, %139 : vector<8x128xf32>
    %141 = arith.negf %140 : vector<8x128xf32>
    %142 = math.exp %141 : vector<8x128xf32>
    %cst_30 = arith.constant 1.000000e+00 : f32
    %143 = vector.broadcast %cst_30 : f32 to vector<8x128xf32>
    %144 = arith.addf %143, %142 : vector<8x128xf32>
    %145 = arith.divf %143, %144 : vector<8x128xf32>
    %146 = vector.extract_strided_slice %135 {offsets = [0, 128], sizes = [8, 128], strides = [1, 1]} : vector<8x384xf32> to vector<8x128xf32>
    %147 = vector.extract_strided_slice %137 {offsets = [0, 128], sizes = [8, 128], strides = [1, 1]} : vector<8x384xf32> to vector<8x128xf32>
    %148 = arith.addf %146, %147 : vector<8x128xf32>
    %149 = arith.negf %148 : vector<8x128xf32>
    %150 = math.exp %149 : vector<8x128xf32>
    %cst_31 = arith.constant 1.000000e+00 : f32
    %151 = vector.broadcast %cst_31 : f32 to vector<8x128xf32>
    %152 = arith.addf %151, %150 : vector<8x128xf32>
    %153 = arith.divf %151, %152 : vector<8x128xf32>
    %154 = vector.extract_strided_slice %135 {offsets = [0, 256], sizes = [8, 128], strides = [1, 1]} : vector<8x384xf32> to vector<8x128xf32>
    %155 = vector.extract_strided_slice %137 {offsets = [0, 256], sizes = [8, 128], strides = [1, 1]} : vector<8x384xf32> to vector<8x128xf32>
    %156 = arith.addf %155, %6 : vector<8x128xf32>
    %157 = arith.mulf %145, %156 : vector<8x128xf32>
    %158 = arith.addf %154, %157 : vector<8x128xf32>
    %159 = math.tanh %158 : vector<8x128xf32>
    %cst_32 = arith.constant 1.000000e+00 : f32
    %160 = vector.broadcast %cst_32 : f32 to vector<8x128xf32>
    %161 = arith.subf %160, %153 : vector<8x128xf32>
    %162 = arith.mulf %161, %159 : vector<8x128xf32>
    %163 = arith.mulf %153, %131 : vector<8x128xf32>
    %164 = arith.addf %162, %163 : vector<8x128xf32>
    %165 = arith.addi %7, %c3_i32 : i32
    %c8_i32_33 = arith.constant 8 : i32
    %166 = arith.cmpi slt, %165, %c8_i32_33 : i32
    %167 = arith.extui %166 : i1 to i32
    %168 = arith.sitofp %167 : i32 to f32
    %169 = arith.subf %164, %131 : vector<8x128xf32>
    %170 = vector.broadcast %168 : f32 to vector<8x128xf32>
    %171 = arith.mulf %170, %169 : vector<8x128xf32>
    %172 = arith.addf %131, %171 : vector<8x128xf32>
    %c4_i32 = arith.constant 4 : i32
    %173 = arith.index_cast %c4_i32 : i32 to index
    %c0_34 = arith.constant 0 : index
    %c0_35 = arith.constant 0 : index
    %174 = vector.load %arg2[%173, %c0_34, %c0_35] : memref<8x8x384xbf16, #tpu.memory_space<vmem>>, vector<1x8x384xbf16>
    %175 = vector.shape_cast %174 : vector<1x8x384xbf16> to vector<8x384xbf16>
    %176 = arith.extf %175 : vector<8x384xbf16> to vector<8x384xf32>
    %177 = arith.truncf %172 : vector<8x128xf32> to vector<8x128xbf16>
    %cst_36 = arith.constant dense<0.000000e+00> : vector<8x384xf32>
    %178 = tpu.matmul %177, %3, %cst_36 {dimension_numbers = #tpu.dot_dimension_numbers<[1], [0], [0], [1], [0, 0, 1, 1], [], []>} : vector<8x128xbf16>, vector<128x384xbf16>, vector<8x384xf32> -> vector<8x384xf32>
    %179 = vector.extract_strided_slice %176 {offsets = [0, 0], sizes = [8, 128], strides = [1, 1]} : vector<8x384xf32> to vector<8x128xf32>
    %180 = vector.extract_strided_slice %178 {offsets = [0, 0], sizes = [8, 128], strides = [1, 1]} : vector<8x384xf32> to vector<8x128xf32>
    %181 = arith.addf %179, %180 : vector<8x128xf32>
    %182 = arith.negf %181 : vector<8x128xf32>
    %183 = math.exp %182 : vector<8x128xf32>
    %cst_37 = arith.constant 1.000000e+00 : f32
    %184 = vector.broadcast %cst_37 : f32 to vector<8x128xf32>
    %185 = arith.addf %184, %183 : vector<8x128xf32>
    %186 = arith.divf %184, %185 : vector<8x128xf32>
    %187 = vector.extract_strided_slice %176 {offsets = [0, 128], sizes = [8, 128], strides = [1, 1]} : vector<8x384xf32> to vector<8x128xf32>
    %188 = vector.extract_strided_slice %178 {offsets = [0, 128], sizes = [8, 128], strides = [1, 1]} : vector<8x384xf32> to vector<8x128xf32>
    %189 = arith.addf %187, %188 : vector<8x128xf32>
    %190 = arith.negf %189 : vector<8x128xf32>
    %191 = math.exp %190 : vector<8x128xf32>
    %cst_38 = arith.constant 1.000000e+00 : f32
    %192 = vector.broadcast %cst_38 : f32 to vector<8x128xf32>
    %193 = arith.addf %192, %191 : vector<8x128xf32>
    %194 = arith.divf %192, %193 : vector<8x128xf32>
    %195 = vector.extract_strided_slice %176 {offsets = [0, 256], sizes = [8, 128], strides = [1, 1]} : vector<8x384xf32> to vector<8x128xf32>
    %196 = vector.extract_strided_slice %178 {offsets = [0, 256], sizes = [8, 128], strides = [1, 1]} : vector<8x384xf32> to vector<8x128xf32>
    %197 = arith.addf %196, %6 : vector<8x128xf32>
    %198 = arith.mulf %186, %197 : vector<8x128xf32>
    %199 = arith.addf %195, %198 : vector<8x128xf32>
    %200 = math.tanh %199 : vector<8x128xf32>
    %cst_39 = arith.constant 1.000000e+00 : f32
    %201 = vector.broadcast %cst_39 : f32 to vector<8x128xf32>
    %202 = arith.subf %201, %194 : vector<8x128xf32>
    %203 = arith.mulf %202, %200 : vector<8x128xf32>
    %204 = arith.mulf %194, %172 : vector<8x128xf32>
    %205 = arith.addf %203, %204 : vector<8x128xf32>
    %206 = arith.addi %7, %c4_i32 : i32
    %c8_i32_40 = arith.constant 8 : i32
    %207 = arith.cmpi slt, %206, %c8_i32_40 : i32
    %208 = arith.extui %207 : i1 to i32
    %209 = arith.sitofp %208 : i32 to f32
    %210 = arith.subf %205, %172 : vector<8x128xf32>
    %211 = vector.broadcast %209 : f32 to vector<8x128xf32>
    %212 = arith.mulf %211, %210 : vector<8x128xf32>
    %213 = arith.addf %172, %212 : vector<8x128xf32>
    %c5_i32 = arith.constant 5 : i32
    %214 = arith.index_cast %c5_i32 : i32 to index
    %c0_41 = arith.constant 0 : index
    %c0_42 = arith.constant 0 : index
    %215 = vector.load %arg2[%214, %c0_41, %c0_42] : memref<8x8x384xbf16, #tpu.memory_space<vmem>>, vector<1x8x384xbf16>
    %216 = vector.shape_cast %215 : vector<1x8x384xbf16> to vector<8x384xbf16>
    %217 = arith.extf %216 : vector<8x384xbf16> to vector<8x384xf32>
    %218 = arith.truncf %213 : vector<8x128xf32> to vector<8x128xbf16>
    %cst_43 = arith.constant dense<0.000000e+00> : vector<8x384xf32>
    %219 = tpu.matmul %218, %3, %cst_43 {dimension_numbers = #tpu.dot_dimension_numbers<[1], [0], [0], [1], [0, 0, 1, 1], [], []>} : vector<8x128xbf16>, vector<128x384xbf16>, vector<8x384xf32> -> vector<8x384xf32>
    %220 = vector.extract_strided_slice %217 {offsets = [0, 0], sizes = [8, 128], strides = [1, 1]} : vector<8x384xf32> to vector<8x128xf32>
    %221 = vector.extract_strided_slice %219 {offsets = [0, 0], sizes = [8, 128], strides = [1, 1]} : vector<8x384xf32> to vector<8x128xf32>
    %222 = arith.addf %220, %221 : vector<8x128xf32>
    %223 = arith.negf %222 : vector<8x128xf32>
    %224 = math.exp %223 : vector<8x128xf32>
    %cst_44 = arith.constant 1.000000e+00 : f32
    %225 = vector.broadcast %cst_44 : f32 to vector<8x128xf32>
    %226 = arith.addf %225, %224 : vector<8x128xf32>
    %227 = arith.divf %225, %226 : vector<8x128xf32>
    %228 = vector.extract_strided_slice %217 {offsets = [0, 128], sizes = [8, 128], strides = [1, 1]} : vector<8x384xf32> to vector<8x128xf32>
    %229 = vector.extract_strided_slice %219 {offsets = [0, 128], sizes = [8, 128], strides = [1, 1]} : vector<8x384xf32> to vector<8x128xf32>
    %230 = arith.addf %228, %229 : vector<8x128xf32>
    %231 = arith.negf %230 : vector<8x128xf32>
    %232 = math.exp %231 : vector<8x128xf32>
    %cst_45 = arith.constant 1.000000e+00 : f32
    %233 = vector.broadcast %cst_45 : f32 to vector<8x128xf32>
    %234 = arith.addf %233, %232 : vector<8x128xf32>
    %235 = arith.divf %233, %234 : vector<8x128xf32>
    %236 = vector.extract_strided_slice %217 {offsets = [0, 256], sizes = [8, 128], strides = [1, 1]} : vector<8x384xf32> to vector<8x128xf32>
    %237 = vector.extract_strided_slice %219 {offsets = [0, 256], sizes = [8, 128], strides = [1, 1]} : vector<8x384xf32> to vector<8x128xf32>
    %238 = arith.addf %237, %6 : vector<8x128xf32>
    %239 = arith.mulf %227, %238 : vector<8x128xf32>
    %240 = arith.addf %236, %239 : vector<8x128xf32>
    %241 = math.tanh %240 : vector<8x128xf32>
    %cst_46 = arith.constant 1.000000e+00 : f32
    %242 = vector.broadcast %cst_46 : f32 to vector<8x128xf32>
    %243 = arith.subf %242, %235 : vector<8x128xf32>
    %244 = arith.mulf %243, %241 : vector<8x128xf32>
    %245 = arith.mulf %235, %213 : vector<8x128xf32>
    %246 = arith.addf %244, %245 : vector<8x128xf32>
    %247 = arith.addi %7, %c5_i32 : i32
    %c8_i32_47 = arith.constant 8 : i32
    %248 = arith.cmpi slt, %247, %c8_i32_47 : i32
    %249 = arith.extui %248 : i1 to i32
    %250 = arith.sitofp %249 : i32 to f32
    %251 = arith.subf %246, %213 : vector<8x128xf32>
    %252 = vector.broadcast %250 : f32 to vector<8x128xf32>
    %253 = arith.mulf %252, %251 : vector<8x128xf32>
    %254 = arith.addf %213, %253 : vector<8x128xf32>
    %c6_i32 = arith.constant 6 : i32
    %255 = arith.index_cast %c6_i32 : i32 to index
    %c0_48 = arith.constant 0 : index
    %c0_49 = arith.constant 0 : index
    %256 = vector.load %arg2[%255, %c0_48, %c0_49] : memref<8x8x384xbf16, #tpu.memory_space<vmem>>, vector<1x8x384xbf16>
    %257 = vector.shape_cast %256 : vector<1x8x384xbf16> to vector<8x384xbf16>
    %258 = arith.extf %257 : vector<8x384xbf16> to vector<8x384xf32>
    %259 = arith.truncf %254 : vector<8x128xf32> to vector<8x128xbf16>
    %cst_50 = arith.constant dense<0.000000e+00> : vector<8x384xf32>
    %260 = tpu.matmul %259, %3, %cst_50 {dimension_numbers = #tpu.dot_dimension_numbers<[1], [0], [0], [1], [0, 0, 1, 1], [], []>} : vector<8x128xbf16>, vector<128x384xbf16>, vector<8x384xf32> -> vector<8x384xf32>
    %261 = vector.extract_strided_slice %258 {offsets = [0, 0], sizes = [8, 128], strides = [1, 1]} : vector<8x384xf32> to vector<8x128xf32>
    %262 = vector.extract_strided_slice %260 {offsets = [0, 0], sizes = [8, 128], strides = [1, 1]} : vector<8x384xf32> to vector<8x128xf32>
    %263 = arith.addf %261, %262 : vector<8x128xf32>
    %264 = arith.negf %263 : vector<8x128xf32>
    %265 = math.exp %264 : vector<8x128xf32>
    %cst_51 = arith.constant 1.000000e+00 : f32
    %266 = vector.broadcast %cst_51 : f32 to vector<8x128xf32>
    %267 = arith.addf %266, %265 : vector<8x128xf32>
    %268 = arith.divf %266, %267 : vector<8x128xf32>
    %269 = vector.extract_strided_slice %258 {offsets = [0, 128], sizes = [8, 128], strides = [1, 1]} : vector<8x384xf32> to vector<8x128xf32>
    %270 = vector.extract_strided_slice %260 {offsets = [0, 128], sizes = [8, 128], strides = [1, 1]} : vector<8x384xf32> to vector<8x128xf32>
    %271 = arith.addf %269, %270 : vector<8x128xf32>
    %272 = arith.negf %271 : vector<8x128xf32>
    %273 = math.exp %272 : vector<8x128xf32>
    %cst_52 = arith.constant 1.000000e+00 : f32
    %274 = vector.broadcast %cst_52 : f32 to vector<8x128xf32>
    %275 = arith.addf %274, %273 : vector<8x128xf32>
    %276 = arith.divf %274, %275 : vector<8x128xf32>
    %277 = vector.extract_strided_slice %258 {offsets = [0, 256], sizes = [8, 128], strides = [1, 1]} : vector<8x384xf32> to vector<8x128xf32>
    %278 = vector.extract_strided_slice %260 {offsets = [0, 256], sizes = [8, 128], strides = [1, 1]} : vector<8x384xf32> to vector<8x128xf32>
    %279 = arith.addf %278, %6 : vector<8x128xf32>
    %280 = arith.mulf %268, %279 : vector<8x128xf32>
    %281 = arith.addf %277, %280 : vector<8x128xf32>
    %282 = math.tanh %281 : vector<8x128xf32>
    %cst_53 = arith.constant 1.000000e+00 : f32
    %283 = vector.broadcast %cst_53 : f32 to vector<8x128xf32>
    %284 = arith.subf %283, %276 : vector<8x128xf32>
    %285 = arith.mulf %284, %282 : vector<8x128xf32>
    %286 = arith.mulf %276, %254 : vector<8x128xf32>
    %287 = arith.addf %285, %286 : vector<8x128xf32>
    %288 = arith.addi %7, %c6_i32 : i32
    %c8_i32_54 = arith.constant 8 : i32
    %289 = arith.cmpi slt, %288, %c8_i32_54 : i32
    %290 = arith.extui %289 : i1 to i32
    %291 = arith.sitofp %290 : i32 to f32
    %292 = arith.subf %287, %254 : vector<8x128xf32>
    %293 = vector.broadcast %291 : f32 to vector<8x128xf32>
    %294 = arith.mulf %293, %292 : vector<8x128xf32>
    %295 = arith.addf %254, %294 : vector<8x128xf32>
    %c7_i32 = arith.constant 7 : i32
    %296 = arith.index_cast %c7_i32 : i32 to index
    %c0_55 = arith.constant 0 : index
    %c0_56 = arith.constant 0 : index
    %297 = vector.load %arg2[%296, %c0_55, %c0_56] : memref<8x8x384xbf16, #tpu.memory_space<vmem>>, vector<1x8x384xbf16>
    %298 = vector.shape_cast %297 : vector<1x8x384xbf16> to vector<8x384xbf16>
    %299 = arith.extf %298 : vector<8x384xbf16> to vector<8x384xf32>
    %300 = arith.truncf %295 : vector<8x128xf32> to vector<8x128xbf16>
    %cst_57 = arith.constant dense<0.000000e+00> : vector<8x384xf32>
    %301 = tpu.matmul %300, %3, %cst_57 {dimension_numbers = #tpu.dot_dimension_numbers<[1], [0], [0], [1], [0, 0, 1, 1], [], []>} : vector<8x128xbf16>, vector<128x384xbf16>, vector<8x384xf32> -> vector<8x384xf32>
    %302 = vector.extract_strided_slice %299 {offsets = [0, 0], sizes = [8, 128], strides = [1, 1]} : vector<8x384xf32> to vector<8x128xf32>
    %303 = vector.extract_strided_slice %301 {offsets = [0, 0], sizes = [8, 128], strides = [1, 1]} : vector<8x384xf32> to vector<8x128xf32>
    %304 = arith.addf %302, %303 : vector<8x128xf32>
    %305 = arith.negf %304 : vector<8x128xf32>
    %306 = math.exp %305 : vector<8x128xf32>
    %cst_58 = arith.constant 1.000000e+00 : f32
    %307 = vector.broadcast %cst_58 : f32 to vector<8x128xf32>
    %308 = arith.addf %307, %306 : vector<8x128xf32>
    %309 = arith.divf %307, %308 : vector<8x128xf32>
    %310 = vector.extract_strided_slice %299 {offsets = [0, 128], sizes = [8, 128], strides = [1, 1]} : vector<8x384xf32> to vector<8x128xf32>
    %311 = vector.extract_strided_slice %301 {offsets = [0, 128], sizes = [8, 128], strides = [1, 1]} : vector<8x384xf32> to vector<8x128xf32>
    %312 = arith.addf %310, %311 : vector<8x128xf32>
    %313 = arith.negf %312 : vector<8x128xf32>
    %314 = math.exp %313 : vector<8x128xf32>
    %cst_59 = arith.constant 1.000000e+00 : f32
    %315 = vector.broadcast %cst_59 : f32 to vector<8x128xf32>
    %316 = arith.addf %315, %314 : vector<8x128xf32>
    %317 = arith.divf %315, %316 : vector<8x128xf32>
    %318 = vector.extract_strided_slice %299 {offsets = [0, 256], sizes = [8, 128], strides = [1, 1]} : vector<8x384xf32> to vector<8x128xf32>
    %319 = vector.extract_strided_slice %301 {offsets = [0, 256], sizes = [8, 128], strides = [1, 1]} : vector<8x384xf32> to vector<8x128xf32>
    %320 = arith.addf %319, %6 : vector<8x128xf32>
    %321 = arith.mulf %309, %320 : vector<8x128xf32>
    %322 = arith.addf %318, %321 : vector<8x128xf32>
    %323 = math.tanh %322 : vector<8x128xf32>
    %cst_60 = arith.constant 1.000000e+00 : f32
    %324 = vector.broadcast %cst_60 : f32 to vector<8x128xf32>
    %325 = arith.subf %324, %317 : vector<8x128xf32>
    %326 = arith.mulf %325, %323 : vector<8x128xf32>
    %327 = arith.mulf %317, %295 : vector<8x128xf32>
    %328 = arith.addf %326, %327 : vector<8x128xf32>
    %329 = arith.addi %7, %c7_i32 : i32
    %c8_i32_61 = arith.constant 8 : i32
    %330 = arith.cmpi slt, %329, %c8_i32_61 : i32
    %331 = arith.extui %330 : i1 to i32
    %332 = arith.sitofp %331 : i32 to f32
    %333 = arith.subf %328, %295 : vector<8x128xf32>
    %334 = vector.broadcast %332 : f32 to vector<8x128xf32>
    %335 = arith.mulf %334, %333 : vector<8x128xf32>
    %336 = arith.addf %295, %335 : vector<8x128xf32>
    %c8_i32_62 = arith.constant 8 : i32
    %c0_63 = arith.constant 0 : index
    %c0_64 = arith.constant 0 : index
    %337 = vector.load %arg8[%c0_63, %c0_64] : memref<8x128xf32, #tpu.memory_space<vmem>>, vector<8x128xf32>
    tpu.vector_store %arg8[%c0_63, %c0_64], %336 {strides = array<i32>} : memref<8x128xf32, #tpu.memory_space<vmem>>, vector<8x128xf32>,
    %c0_i32_65 = arith.constant 0 : i32
    %338 = arith.cmpi eq, %arg1, %c0_i32_65 : i32
    %339 = arith.extui %338 : i1 to i32
    %c0_i32_66 = arith.constant 0 : i32
    %340 = arith.cmpi ne, %339, %c0_i32_66 : i32
    scf.if %340 {
      %341 = arith.truncf %336 : vector<8x128xf32> to vector<8x128xbf16>
      %c0_67 = arith.constant 0 : index
      %c0_68 = arith.constant 0 : index
      %342 = vector.load %arg5[%c0_67, %c0_68] : memref<128x128xbf16, #tpu.memory_space<vmem>>, vector<128x128xbf16>
      %cst_69 = arith.constant dense<0.000000e+00> : vector<8x128xf32>
      %343 = tpu.matmul %341, %342, %cst_69 {dimension_numbers = #tpu.dot_dimension_numbers<[1], [0], [0], [1], [0, 0, 1, 1], [], []>} : vector<8x128xbf16>, vector<128x128xbf16>, vector<8x128xf32> -> vector<8x128xf32>
      %c0_70 = arith.constant 0 : index
      %c0_71 = arith.constant 0 : index
      %344 = vector.load %arg6[%c0_70, %c0_71] : memref<1x128xf32, #tpu.memory_space<vmem>>, vector<1x128xf32>
      %345 = vector.broadcast %344 : vector<1x128xf32> to vector<8x128xf32>
      %346 = arith.addf %343, %345 : vector<8x128xf32>
      %c0_72 = arith.constant 0 : index
      %c0_73 = arith.constant 0 : index
      %347 = vector.load %arg7[%c0_72, %c0_73] : memref<8x128xf32, #tpu.memory_space<vmem>>, vector<8x128xf32>
      tpu.vector_store %arg7[%c0_72, %c0_73], %346 {strides = array<i32>} : memref<8x128xf32, #tpu.memory_space<vmem>>, vector<8x128xf32>,
    } else {
    }
    return
  }
  func.func @transform_0(%arg0: i32, %arg1: i32) -> (i32, i32, i32) {
    %c0_i32 = arith.constant 0 : i32
    %c0_i32_0 = arith.constant 0 : i32
    return %arg1, %arg0, %c0_i32 : i32, i32, i32
  }
  func.func @transform_1(%arg0: i32, %arg1: i32) -> (i32, i32) {
    %c0_i32 = arith.constant 0 : i32
    %c0_i32_0 = arith.constant 0 : i32
    %c0_i32_1 = arith.constant 0 : i32
    return %c0_i32, %c0_i32_0 : i32, i32
  }
  func.func @transform_2(%arg0: i32, %arg1: i32) -> (i32, i32) {
    %c0_i32 = arith.constant 0 : i32
    %c0_i32_0 = arith.constant 0 : i32
    %c0_i32_1 = arith.constant 0 : i32
    return %c0_i32, %c0_i32_0 : i32, i32
  }
  func.func @transform_3(%arg0: i32, %arg1: i32) -> (i32, i32) {
    %c0_i32 = arith.constant 0 : i32
    %c0_i32_0 = arith.constant 0 : i32
    %c0_i32_1 = arith.constant 0 : i32
    return %c0_i32, %c0_i32_0 : i32, i32
  }
  func.func @transform_4(%arg0: i32, %arg1: i32) -> (i32, i32) {
    %c0_i32 = arith.constant 0 : i32
    %c0_i32_0 = arith.constant 0 : i32
    %c0_i32_1 = arith.constant 0 : i32
    return %c0_i32, %c0_i32_0 : i32, i32
  }
  func.func @transform_5(%arg0: i32, %arg1: i32) -> (i32, i32) {
    %c0_i32 = arith.constant 0 : i32
    %c0_i32_0 = arith.constant 0 : i32
    return %arg0, %c0_i32 : i32, i32
  }
}

</mosaic_0001>

<llo_original>
// kernel: tpu_custom_call.1
$region0: #{tpu_custom_call.1}
  #allocation0 [shape = 'u32[]', space=smem, size = 0x4, offset = 0x4, fixed_abs, tag = 'smem constant byte address 0x4 - core index']
  #allocation1 [shape = 'u32[144,128]{1,0:T(1,128)}', space=vmem, size = 0x12000, scoped, tag = 'internal scratch']
  #allocation2 [shape = 'f32[8,128]{1,0:T(8,128)}', space=vmem, size = 0x1000, scoped, tag = 'scratch operand']
  %s0 = inlined_call_operand.hbm [shape: bf16[8,8,384], index: 0, kind: input, shape index: {}]
  %s1 = inlined_call_operand.hbm [shape: bf16[128,384], index: 1, kind: input, shape index: {}]
  %s2 = inlined_call_operand.vmem [shape: f32[1,128], index: 2, kind: input, shape index: {}]
  %s3 = inlined_call_operand.hbm [shape: bf16[128,128], index: 3, kind: input, shape index: {}]
  %s4 = inlined_call_operand.vmem [shape: f32[1,128], index: 4, kind: input, shape index: {}]
  %s5 = inlined_call_operand.hbm [shape: f32[8,128], index: 5, kind: output, shape index: {}]
  %s6 = sld [smem:[#allocation0]]
  $region50: #{tpu_custom_call.1} parent=0
    _
  %s8 = ssub.s32 1, %s6
  %s9 = scalar_select 0, %s8, %s6
  $region1: #{tpu_custom_call.1} parent=0
    #allocation3 [shape = 'u8[49152]{0}', space=vmem, size = 0xc000, scoped, tag = 'input window, operand 0, single buffered']
    #allocation4 [shape = 's32[1]{0}', space=sflag, size = 0x4, scoped, tag = 'scoped memory for tpu_custom_call.1']
    #allocation5 [shape = 's32[1]{0}', space=sflag, size = 0x4, scoped, tag = 'scoped memory for tpu_custom_call.1']
    #allocation6 [shape = 'u8[98304]{0}', space=vmem, size = 0x18000, scoped, tag = 'input window, operand 1, single buffered']
    #allocation7 [shape = 's32[1]{0}', space=sflag, size = 0x4, scoped, tag = 'scoped memory for tpu_custom_call.1']
    #allocation8 [shape = 'u8[32768]{0}', space=vmem, size = 0x8000, scoped, tag = 'input window, operand 3, single buffered']
    #allocation9 [shape = 'u8[4096]{0}', space=vmem, size = 0x1000, scoped, tag = 'output window, operand 0, single buffered']
    %10 = vsyncpa [#allocation4], 0
    %11 = vsyncpa [#allocation7], 0
    %12 = vsyncpa [#allocation5], 0
    // Predicated region
    $region2: #{tpu_custom_call.1} parent=1 // pred_check
      _
    $region3: #{tpu_custom_call.1} parent=1 // pred_check_branch
      %14 = sbr.rel (0) target = $region5
    $region4: #{tpu_custom_call.1} parent=1 // pred_region
      %s16 = ssub.s32 1536, 1536
      %17 = vsyncadd [#allocation4], %s16
      %s18 = sshll.u32 [#allocation3], 4
      %s19 = int_to_ptr.vmem [resolvable:$true] %s18
      %24 = dma.hbm_to_vmem [thread:$0]  %s0, 1536, %s19, [#allocation4], 192, 192, 12
    $region5: #{tpu_custom_call.1} parent=1 // pred_fallthru
      _
    // Predicated region
    $region6: #{tpu_custom_call.1} parent=1 // pred_check
      _
    $region7: #{tpu_custom_call.1} parent=1 // pred_check_branch
      %26 = sbr.rel (0) target = $region9
    $region8: #{tpu_custom_call.1} parent=1 // pred_region
      %s28 = ssub.s32 3072, 3072
      %29 = vsyncadd [#allocation7], %s28
      %s30 = sshll.u32 [#allocation6], 4
      %s31 = int_to_ptr.vmem [resolvable:$true] %s30
      %36 = dma.hbm_to_vmem [thread:$0]  %s1, 3072, %s31, [#allocation7], 192, 192, 12
    $region9: #{tpu_custom_call.1} parent=1 // pred_fallthru
      _
    // Predicated region
    $region10: #{tpu_custom_call.1} parent=1 // pred_check
      _
    $region11: #{tpu_custom_call.1} parent=1 // pred_check_branch
      %38 = sbr.rel (0) target = $region13
    $region12: #{tpu_custom_call.1} parent=1 // pred_region
      _
    $region13: #{tpu_custom_call.1} parent=1 // pred_fallthru
      _
    // Predicated region
    $region14: #{tpu_custom_call.1} parent=1 // pred_check
      _
    $region15: #{tpu_custom_call.1} parent=1 // pred_check_branch
      %40 = sbr.rel (0) target = $region17
    $region16: #{tpu_custom_call.1} parent=1 // pred_region
      %s42 = ssub.s32 1024, 1024
      %43 = vsyncadd [#allocation7], %s42
      %s44 = sshll.u32 [#allocation8], 4
      %s45 = int_to_ptr.vmem [resolvable:$true] %s44
      %50 = dma.hbm_to_vmem [thread:$0]  %s3, 1024, %s45, [#allocation7], 64, 64, 4
    $region17: #{tpu_custom_call.1} parent=1 // pred_fallthru
      _
    // Predicated region
    $region18: #{tpu_custom_call.1} parent=1 // pred_check
      _
    $region19: #{tpu_custom_call.1} parent=1 // pred_check_branch
      %52 = sbr.rel (0) target = $region21
    $region20: #{tpu_custom_call.1} parent=1 // pred_region
      _
    $region21: #{tpu_custom_call.1} parent=1 // pred_fallthru
      _
    // Predicated region
    $region22: #{tpu_custom_call.1} parent=1 // pred_check
      _
    $region23: #{tpu_custom_call.1} parent=1 // pred_check_branch
      %54 = sbr.rel (0) target = $region25
    $region24: #{tpu_custom_call.1} parent=1 // pred_region
      %55 = dma.done [#allocation4], 1536
    $region25: #{tpu_custom_call.1} parent=1 // pred_fallthru
      _
    // Predicated region
    $region26: #{tpu_custom_call.1} parent=1 // pred_check
      _
    $region27: #{tpu_custom_call.1} parent=1 // pred_check_branch
      %57 = sbr.rel (0) target = $region29
    $region28: #{tpu_custom_call.1} parent=1 // pred_region
      %58 = dma.done [#allocation7], 3072
    $region29: #{tpu_custom_call.1} parent=1 // pred_fallthru
      _
    // Predicated region
    $region30: #{tpu_custom_call.1} parent=1 // pred_check
      _
    $region31: #{tpu_custom_call.1} parent=1 // pred_check_branch
      %60 = sbr.rel (0) target = $region33
    $region32: #{tpu_custom_call.1} parent=1 // pred_region
      %61 = dma.done [#allocation7], 1024
    $region33: #{tpu_custom_call.1} parent=1 // pred_fallthru
      _
    %p63 = scmp.eq.s32.totalorder 0, 0
    // Predicated region
    $region34: #{tpu_custom_call.1} parent=1 // pred_check
      %p64 = pneg %p63
    $region35: #{tpu_custom_call.1} parent=1 // pred_check_branch
      %66 = sbr.rel (%p64) target = $region37
    $region36: #{tpu_custom_call.1} parent=1 // pred_region
      %67 = vst [vmem:[#allocation2] sm:$0xff] 0.0
    $region37: #{tpu_custom_call.1} parent=1 // pred_fallthru
      _
    %v68 = vld [vmem:[#allocation6] sm:$0xff]
    %v69 = vld [vmem:[#allocation6 + $0x8] sm:$0xf]
    %v70 = vld [vmem:[#allocation6 + $0xc] sm:$0xff]
    %v71 = vld [vmem:[#allocation6 + $0x14] sm:$0xf]
    %v72 = vld [vmem:[#allocation6 + $0x18] sm:$0xff]
    %v73 = vld [vmem:[#allocation6 + $0x20] sm:$0xf]
    %v74 = vld [vmem:[#allocation6 + $0x24] sm:$0xff]
    %v75 = vld [vmem:[#allocation6 + $0x2c] sm:$0xf]
    %v76 = vld [vmem:[#allocation6 + $0x30] sm:$0xff]
    %v77 = vld [vmem:[#allocation6 + $0x38] sm:$0xf]
    %v78 = vld [vmem:[#allocation6 + $0x3c] sm:$0xff]
    %v79 = vld [vmem:[#allocation6 + $0x44] sm:$0xf]
    %v80 = vld [vmem:[#allocation6 + $0x48] sm:$0xff]
    %v81 = vld [vmem:[#allocation6 + $0x50] sm:$0xf]
    %v82 = vld [vmem:[#allocation6 + $0x54] sm:$0xff]
    %v83 = vld [vmem:[#allocation6 + $0x5c] sm:$0xf]
    %v84 = vld [vmem:[#allocation6 + $0x60] sm:$0xff]
    %v85 = vld [vmem:[#allocation6 + $0x68] sm:$0xf]
    %v86 = vld [vmem:[#allocation6 + $0x6c] sm:$0xff]
    %v87 = vld [vmem:[#allocation6 + $0x74] sm:$0xf]
    %v88 = vld [vmem:[#allocation6 + $0x78] sm:$0xff]
    %v89 = vld [vmem:[#allocation6 + $0x80] sm:$0xf]
    %v90 = vld [vmem:[#allocation6 + $0x84] sm:$0xff]
    %v91 = vld [vmem:[#allocation6 + $0x8c] sm:$0xf]
    %v92 = vld [vmem:[#allocation6 + $0x90] sm:$0xff]
    %v93 = vld [vmem:[#allocation6 + $0x98] sm:$0xf]
    %v94 = vld [vmem:[#allocation6 + $0x9c] sm:$0xff]
    %v95 = vld [vmem:[#allocation6 + $0xa4] sm:$0xf]
    %v96 = vld [vmem:[#allocation6 + $0xa8] sm:$0xff]
    %v97 = vld [vmem:[#allocation6 + $0xb0] sm:$0xf]
    %v98 = vld [vmem:[#allocation6 + $0xb4] sm:$0xff]
    %v99 = vld [vmem:[#allocation6 + $0xbc] sm:$0xf]
    %v100 = vld [vmem:[%s2] sm:$0x1]
    %v102 = vlaneseq
    %v103 = vshrl.u32 %v102, 7
    %v104 = vsub.s32 0, %v103
    %v105 = vrot.slane %v100, %v104
    %s107 = smul.u32 0, 8
    %v108 = vld [vmem:[#allocation2] sm:$0xff]
    %v109 = vld [vmem:[#allocation3] sm:$0xff]
    %v110 = vld [vmem:[#allocation3 + $0x8] sm:$0xf]
    %v111 = vunpack.c.l.bf16 %v109
    %v112 = vunpack.c.h.bf16 %v109
    %v113 = vunpack.c.l.bf16 %v110
    %v114 = vpack.c.bf16 %v108, %v108
    %v147 = vunpack.c.l.b16 %v68
    %v148 = vunpack.c.h.b16 %v68
    %v149 = vunpack.c.l.b16 %v69
    %v150 = vunpack.c.l.b16 %v70
    %v151 = vunpack.c.h.b16 %v70
    %v152 = vunpack.c.l.b16 %v71
    %v153 = vunpack.c.l.b16 %v72
    %v154 = vunpack.c.h.b16 %v72
    %v155 = vunpack.c.l.b16 %v73
    %v156 = vunpack.c.l.b16 %v74
    %v157 = vunpack.c.h.b16 %v74
    %v158 = vunpack.c.l.b16 %v75
    %v159 = vunpack.c.l.b16 %v76
    %v160 = vunpack.c.h.b16 %v76
    %v161 = vunpack.c.l.b16 %v77
    %v162 = vunpack.c.l.b16 %v78
    %v163 = vunpack.c.h.b16 %v78
    %v164 = vunpack.c.l.b16 %v79
    %v165 = vunpack.c.l.b16 %v80
    %v166 = vunpack.c.h.b16 %v80
    %v167 = vunpack.c.l.b16 %v81
    %v168 = vunpack.c.l.b16 %v82
    %v169 = vunpack.c.h.b16 %v82
    %v170 = vunpack.c.l.b16 %v83
    %v171 = vunpack.c.l.b16 %v84
    %v172 = vunpack.c.h.b16 %v84
    %v173 = vunpack.c.l.b16 %v85
    %v174 = vunpack.c.l.b16 %v86
    %v175 = vunpack.c.h.b16 %v86
    %v176 = vunpack.c.l.b16 %v87
    %v177 = vunpack.c.l.b16 %v88
    %v178 = vunpack.c.h.b16 %v88
    %v179 = vunpack.c.l.b16 %v89
    %v180 = vunpack.c.l.b16 %v90
    %v181 = vunpack.c.h.b16 %v90
    %v182 = vunpack.c.l.b16 %v91
    %v183 = vunpack.c.l.b16 %v92
    %v184 = vunpack.c.h.b16 %v92
    %v185 = vunpack.c.l.b16 %v93
    %v186 = vunpack.c.l.b16 %v94
    %v187 = vunpack.c.h.b16 %v94
    %v188 = vunpack.c.l.b16 %v95
    %v189 = vunpack.c.l.b16 %v96
    %v190 = vunpack.c.h.b16 %v96
    %v191 = vunpack.c.l.b16 %v97
    %v192 = vunpack.c.l.b16 %v98
    %v193 = vunpack.c.h.b16 %v98
    %v194 = vunpack.c.l.b16 %v99
    %v195 = vpack.c.b16 %v150, %v147
    %v196 = vpack.c.b16 %v151, %v148
    %v197 = vpack.c.b16 %v152, %v149
    %v198 = vpack.c.b16 %v156, %v153
    %v199 = vpack.c.b16 %v157, %v154
    %v200 = vpack.c.b16 %v158, %v155
    %v201 = vpack.c.b16 %v162, %v159
    %v202 = vpack.c.b16 %v163, %v160
    %v203 = vpack.c.b16 %v164, %v161
    %v204 = vpack.c.b16 %v168, %v165
    %v205 = vpack.c.b16 %v169, %v166
    %v206 = vpack.c.b16 %v170, %v167
    %v207 = vpack.c.b16 %v174, %v171
    %v208 = vpack.c.b16 %v175, %v172
    %v209 = vpack.c.b16 %v176, %v173
    %v210 = vpack.c.b16 %v180, %v177
    %v211 = vpack.c.b16 %v181, %v178
    %v212 = vpack.c.b16 %v182, %v179
    %v213 = vpack.c.b16 %v186, %v183
    %v214 = vpack.c.b16 %v187, %v184
    %v215 = vpack.c.b16 %v188, %v185
    %v216 = vpack.c.b16 %v192, %v189
    %v217 = vpack.c.b16 %v193, %v190
    %v218 = vpack.c.b16 %v194, %v191
    %243 = vmatprep.subr.bf16.mxu0 %v217
    %244 = vmatpush1.bf16.msra.mxu0 %v216
    %245 = vmatprep.subr.bf16.mxu0 %v214
    %246 = vmatpush1.bf16.msra.mxu0 %v213
    %247 = vmatprep.subr.bf16.mxu0 %v211
    %248 = vmatpush1.bf16.msra.mxu0 %v210
    %249 = vmatprep.subr.bf16.mxu0 %v208
    %250 = vmatpush1.bf16.msra.mxu0 %v207
    %251 = vmatprep.subr.bf16.mxu0 %v205
    %252 = vmatpush1.bf16.msra.mxu0 %v204
    %253 = vmatprep.subr.bf16.mxu0 %v202
    %254 = vmatpush1.bf16.msra.mxu0 %v201
    %255 = vmatprep.subr.bf16.mxu0 %v199
    %256 = vmatpush1.bf16.msra.mxu0 %v198
    %257 = vmatprep.subr.bf16.mxu0 %v196
    %258 = vmatpush1.bf16.msra.mxu0 %v195
    %259 = vmatprep.subr.bf16.mxu0 0
    %260 = vmatpush2.bf16.msra.mxu0 0
    %261 = vmatprep.subr.bf16.mxu0 0
    %262 = vmatpush2.bf16.msra.mxu0 0
    %263 = vmatprep.subr.bf16.mxu0 0
    %264 = vmatpush2.bf16.msra.mxu0 0
    %265 = vmatprep.subr.bf16.mxu0 0
    %266 = vmatpush2.bf16.msra.mxu0 0
    %267 = vmatprep.subr.bf16.mxu0 0
    %268 = vmatpush2.bf16.msra.mxu0 0
    %269 = vmatprep.subr.bf16.mxu0 0
    %270 = vmatpush2.bf16.msra.mxu0 0
    %271 = vmatprep.subr.bf16.mxu0 0
    %272 = vmatpush2.bf16.msra.mxu0 0
    %273 = vmatprep.subr.bf16.mxu0 0
    %274 = vmatpush2.bf16.msra.mxu0 0
    %275 = vmatprep.mubr.bf16.mxu0 0
    %276 = vmatmul.mubr.bf16.gmra.mxu0 %v114
    %v277 = vpop.f32.mrf.mxu0
    %v278 = vadd.f32 0.0, %v277
    %v279 = vpop.f32.mrf.mxu0
    %v280 = vadd.f32 0.0, %v279
    %v281 = vpop.f32.mrf.mxu0
    %v282 = vpop.f32.mrf.mxu0
    %283 = vdwg.mxu0
    %284 = vmatprep.subr.bf16.mxu0 0
    %285 = vmatpush1.bf16.msra.mxu0 %v218
    %286 = vmatprep.subr.bf16.mxu0 0
    %287 = vmatpush1.bf16.msra.mxu0 %v215
    %288 = vmatprep.subr.bf16.mxu0 0
    %289 = vmatpush1.bf16.msra.mxu0 %v212
    %290 = vmatprep.subr.bf16.mxu0 0
    %291 = vmatpush1.bf16.msra.mxu0 %v209
    %292 = vmatprep.subr.bf16.mxu0 0
    %293 = vmatpush1.bf16.msra.mxu0 %v206
    %294 = vmatprep.subr.bf16.mxu0 0
    %295 = vmatpush1.bf16.msra.mxu0 %v203
    %296 = vmatprep.subr.bf16.mxu0 0
    %297 = vmatpush1.bf16.msra.mxu0 %v200
    %298 = vmatprep.subr.bf16.mxu0 0
    %299 = vmatpush1.bf16.msra.mxu0 %v197
    %300 = vmatprep.subr.bf16.mxu0 0
    %301 = vmatpush2.bf16.msra.mxu0 0
    %302 = vmatprep.subr.bf16.mxu0 0
    %303 = vmatpush2.bf16.msra.mxu0 0
    %304 = vmatprep.subr.bf16.mxu0 0
    %305 = vmatpush2.bf16.msra.mxu0 0
    %306 = vmatprep.subr.bf16.mxu0 0
    %307 = vmatpush2.bf16.msra.mxu0 0
    %308 = vmatprep.subr.bf16.mxu0 0
    %309 = vmatpush2.bf16.msra.mxu0 0
    %310 = vmatprep.subr.bf16.mxu0 0
    %311 = vmatpush2.bf16.msra.mxu0 0
    %312 = vmatprep.subr.bf16.mxu0 0
    %313 = vmatpush2.bf16.msra.mxu0 0
    %314 = vmatprep.subr.bf16.mxu0 0
    %315 = vmatpush2.bf16.msra.mxu0 0
    %316 = vmatprep.mubr.bf16.mxu0 0
    %317 = vmatmul.mubr.bf16.gmra.mxu0 %v114
    %v318 = vpop.f32.mrf.mxu0
    %v319 = vadd.f32 0.0, %v318
    %v320 = vpop.f32.mrf.mxu0
    %v321 = vpop.f32.mrf.mxu0
    %v322 = vpop.f32.mrf.mxu0
    %323 = vdwg.mxu0
    %v324 = vadd.f32 %v111, %v278
    %v325 = vxor.u32 %v324, 2147483648
    %v326 = vmul.f32 %v325, 1.442695
    %v327 = vpow.pop %v326
    %v328 = vadd.f32 %v327, 1.0
    %v329 = vrcp.pop %v328
    %v330 = vmul.f32 1.0, %v329
    %v331 = vadd.f32 %v112, %v280
    %v332 = vxor.u32 %v331, 2147483648
    %v333 = vmul.f32 %v332, 1.442695
    %v334 = vpow.pop %v333
    %v335 = vadd.f32 %v334, 1.0
    %v336 = vrcp.pop %v335
    %v337 = vmul.f32 1.0, %v336
    %v338 = vadd.f32 %v319, %v105
    %v339 = vmul.f32 %v330, %v338
    %v340 = vadd.f32 %v113, %v339
    %v341 = vtanh.pop %v340
    %v342 = vsub.f32 1.0, %v337
    %v343 = vmul.f32 %v342, %v341
    %v344 = vmul.f32 %v337, %v108
    %v345 = vadd.f32 %v343, %v344
    %p346 = scmp.lt.s32.totalorder %s107, 8
    %s347 = scalar_select %p346, 1, 0
    %s348 = scvt.s32.f32 %s347
    %v349 = vsub.f32 %v345, %v108
    %v350 = vstv %s348
    %v351 = vmul.f32 %v350, %v349
    %v352 = vadd.f32 %v108, %v351
    %s353 = scalar_lea.vmem [#allocation3], 12
    %v354 = vld [vmem:[%s353] sm:$0xff]
    %v355 = vld [vmem:[%s353 + $0x8] sm:$0xf]
    %v356 = vunpack.c.l.bf16 %v354
    %v357 = vunpack.c.h.bf16 %v354
    %v358 = vunpack.c.l.bf16 %v355
    %v359 = vpack.c.bf16 %v352, %v352
    %360 = vmatprep.subr.bf16.mxu0 %v217
    %361 = vmatpush1.bf16.msra.mxu0 %v216
    %362 = vmatprep.subr.bf16.mxu0 %v214
    %363 = vmatpush1.bf16.msra.mxu0 %v213
    %364 = vmatprep.subr.bf16.mxu0 %v211
    %365 = vmatpush1.bf16.msra.mxu0 %v210
    %366 = vmatprep.subr.bf16.mxu0 %v208
    %367 = vmatpush1.bf16.msra.mxu0 %v207
    %368 = vmatprep.subr.bf16.mxu0 %v205
    %369 = vmatpush1.bf16.msra.mxu0 %v204
    %370 = vmatprep.subr.bf16.mxu0 %v202
    %371 = vmatpush1.bf16.msra.mxu0 %v201
    %372 = vmatprep.subr.bf16.mxu0 %v199
    %373 = vmatpush1.bf16.msra.mxu0 %v198
    %374 = vmatprep.subr.bf16.mxu0 %v196
    %375 = vmatpush1.bf16.msra.mxu0 %v195
    %376 = vmatprep.subr.bf16.mxu0 0
    %377 = vmatpush2.bf16.msra.mxu0 0
    %378 = vmatprep.subr.bf16.mxu0 0
    %379 = vmatpush2.bf16.msra.mxu0 0
    %380 = vmatprep.subr.bf16.mxu0 0
    %381 = vmatpush2.bf16.msra.mxu0 0
    %382 = vmatprep.subr.bf16.mxu0 0
    %383 = vmatpush2.bf16.msra.mxu0 0
    %384 = vmatprep.subr.bf16.mxu0 0
    %385 = vmatpush2.bf16.msra.mxu0 0
    %386 = vmatprep.subr.bf16.mxu0 0
    %387 = vmatpush2.bf16.msra.mxu0 0
    %388 = vmatprep.subr.bf16.mxu0 0
    %389 = vmatpush2.bf16.msra.mxu0 0
    %390 = vmatprep.subr.bf16.mxu0 0
    %391 = vmatpush2.bf16.msra.mxu0 0
    %392 = vmatprep.mubr.bf16.mxu0 0
    %393 = vmatmul.mubr.bf16.gmra.mxu0 %v359
    %v394 = vpop.f32.mrf.mxu0
    %v395 = vadd.f32 0.0, %v394
    %v396 = vpop.f32.mrf.mxu0
    %v397 = vadd.f32 0.0, %v396
    %v398 = vpop.f32.mrf.mxu0
    %v399 = vpop.f32.mrf.mxu0
    %400 = vdwg.mxu0
    %401 = vmatprep.subr.bf16.mxu0 0
    %402 = vmatpush1.bf16.msra.mxu0 %v218
    %403 = vmatprep.subr.bf16.mxu0 0
    %404 = vmatpush1.bf16.msra.mxu0 %v215
    %405 = vmatprep.subr.bf16.mxu0 0
    %406 = vmatpush1.bf16.msra.mxu0 %v212
    %407 = vmatprep.subr.bf16.mxu0 0
    %408 = vmatpush1.bf16.msra.mxu0 %v209
    %409 = vmatprep.subr.bf16.mxu0 0
    %410 = vmatpush1.bf16.msra.mxu0 %v206
    %411 = vmatprep.subr.bf16.mxu0 0
    %412 = vmatpush1.bf16.msra.mxu0 %v203
    %413 = vmatprep.subr.bf16.mxu0 0
    %414 = vmatpush1.bf16.msra.mxu0 %v200
    %415 = vmatprep.subr.bf16.mxu0 0
    %416 = vmatpush1.bf16.msra.mxu0 %v197
    %417 = vmatprep.subr.bf16.mxu0 0
    %418 = vmatpush2.bf16.msra.mxu0 0
    %419 = vmatprep.subr.bf16.mxu0 0
    %420 = vmatpush2.bf16.msra.mxu0 0
    %421 = vmatprep.subr.bf16.mxu0 0
    %422 = vmatpush2.bf16.msra.mxu0 0
    %423 = vmatprep.subr.bf16.mxu0 0
    %424 = vmatpush2.bf16.msra.mxu0 0
    %425 = vmatprep.subr.bf16.mxu0 0
    %426 = vmatpush2.bf16.msra.mxu0 0
    %427 = vmatprep.subr.bf16.mxu0 0
    %428 = vmatpush2.bf16.msra.mxu0 0
    %429 = vmatprep.subr.bf16.mxu0 0
    %430 = vmatpush2.bf16.msra.mxu0 0
    %431 = vmatprep.subr.bf16.mxu0 0
    %432 = vmatpush2.bf16.msra.mxu0 0
    %433 = vmatprep.mubr.bf16.mxu0 0
    %434 = vmatmul.mubr.bf16.gmra.mxu0 %v359
    %v435 = vpop.f32.mrf.mxu0
    %v436 = vadd.f32 0.0, %v435
    %v437 = vpop.f32.mrf.mxu0
    %v438 = vpop.f32.mrf.mxu0
    %v439 = vpop.f32.mrf.mxu0
    %440 = vdwg.mxu0
    %v441 = vadd.f32 %v356, %v395
    %v442 = vxor.u32 %v441, 2147483648
    %v443 = vmul.f32 %v442, 1.442695
    %v444 = vpow.pop %v443
    %v445 = vadd.f32 %v444, 1.0
    %v446 = vrcp.pop %v445
    %v447 = vmul.f32 1.0, %v446
    %v448 = vadd.f32 %v357, %v397
    %v449 = vxor.u32 %v448, 2147483648
    %v450 = vmul.f32 %v449, 1.442695
    %v451 = vpow.pop %v450
    %v452 = vadd.f32 %v451, 1.0
    %v453 = vrcp.pop %v452
    %v454 = vmul.f32 1.0, %v453
    %v455 = vadd.f32 %v436, %v105
    %v456 = vmul.f32 %v447, %v455
    %v457 = vadd.f32 %v358, %v456
    %v458 = vtanh.pop %v457
    %v459 = vsub.f32 1.0, %v454
    %v460 = vmul.f32 %v459, %v458
    %v461 = vmul.f32 %v454, %v352
    %v462 = vadd.f32 %v460, %v461
    %s463 = sadd.s32 %s107, 1
    %p464 = scmp.lt.s32.totalorder %s463, 8
    %s465 = scalar_select %p464, 1, 0
    %s466 = scvt.s32.f32 %s465
    %v467 = vsub.f32 %v462, %v352
    %v468 = vstv %s466
    %v469 = vmul.f32 %v468, %v467
    %v470 = vadd.f32 %v352, %v469
    %s471 = scalar_lea.vmem [#allocation3], 24
    %v472 = vld [vmem:[%s471] sm:$0xff]
    %v473 = vld [vmem:[%s471 + $0x8] sm:$0xf]
    %v474 = vunpack.c.l.bf16 %v472
    %v475 = vunpack.c.h.bf16 %v472
    %v476 = vunpack.c.l.bf16 %v473
    %v477 = vpack.c.bf16 %v470, %v470
    %478 = vmatprep.subr.bf16.mxu0 %v217
    %479 = vmatpush1.bf16.msra.mxu0 %v216
    %480 = vmatprep.subr.bf16.mxu0 %v214
    %481 = vmatpush1.bf16.msra.mxu0 %v213
    %482 = vmatprep.subr.bf16.mxu0 %v211
    %483 = vmatpush1.bf16.msra.mxu0 %v210
    %484 = vmatprep.subr.bf16.mxu0 %v208
    %485 = vmatpush1.bf16.msra.mxu0 %v207
    %486 = vmatprep.subr.bf16.mxu0 %v205
    %487 = vmatpush1.bf16.msra.mxu0 %v204
    %488 = vmatprep.subr.bf16.mxu0 %v202
    %489 = vmatpush1.bf16.msra.mxu0 %v201
    %490 = vmatprep.subr.bf16.mxu0 %v199
    %491 = vmatpush1.bf16.msra.mxu0 %v198
    %492 = vmatprep.subr.bf16.mxu0 %v196
    %493 = vmatpush1.bf16.msra.mxu0 %v195
    %494 = vmatprep.subr.bf16.mxu0 0
    %495 = vmatpush2.bf16.msra.mxu0 0
    %496 = vmatprep.subr.bf16.mxu0 0
    %497 = vmatpush2.bf16.msra.mxu0 0
    %498 = vmatprep.subr.bf16.mxu0 0
    %499 = vmatpush2.bf16.msra.mxu0 0
    %500 = vmatprep.subr.bf16.mxu0 0
    %501 = vmatpush2.bf16.msra.mxu0 0
    %502 = vmatprep.subr.bf16.mxu0 0
    %503 = vmatpush2.bf16.msra.mxu0 0
    %504 = vmatprep.subr.bf16.mxu0 0
    %505 = vmatpush2.bf16.msra.mxu0 0
    %506 = vmatprep.subr.bf16.mxu0 0
    %507 = vmatpush2.bf16.msra.mxu0 0
    %508 = vmatprep.subr.bf16.mxu0 0
    %509 = vmatpush2.bf16.msra.mxu0 0
    %510 = vmatprep.mubr.bf16.mxu0 0
    %511 = vmatmul.mubr.bf16.gmra.mxu0 %v477
    %v512 = vpop.f32.mrf.mxu0
    %v513 = vadd.f32 0.0, %v512
    %v514 = vpop.f32.mrf.mxu0
    %v515 = vadd.f32 0.0, %v514
    %v516 = vpop.f32.mrf.mxu0
    %v517 = vpop.f32.mrf.mxu0
    %518 = vdwg.mxu0
    %519 = vmatprep.subr.bf16.mxu0 0
    %520 = vmatpush1.bf16.msra.mxu0 %v218
    %521 = vmatprep.subr.bf16.mxu0 0
    %522 = vmatpush1.bf16.msra.mxu0 %v215
    %523 = vmatprep.subr.bf16.mxu0 0
    %524 = vmatpush1.bf16.msra.mxu0 %v212
    %525 = vmatprep.subr.bf16.mxu0 0
    %526 = vmatpush1.bf16.msra.mxu0 %v209
    %527 = vmatprep.subr.bf16.mxu0 0
    %528 = vmatpush1.bf16.msra.mxu0 %v206
    %529 = vmatprep.subr.bf16.mxu0 0
    %530 = vmatpush1.bf16.msra.mxu0 %v203
    %531 = vmatprep.subr.bf16.mxu0 0
    %532 = vmatpush1.bf16.msra.mxu0 %v200
    %533 = vmatprep.subr.bf16.mxu0 0
    %534 = vmatpush1.bf16.msra.mxu0 %v197
    %535 = vmatprep.subr.bf16.mxu0 0
    %536 = vmatpush2.bf16.msra.mxu0 0
    %537 = vmatprep.subr.bf16.mxu0 0
    %538 = vmatpush2.bf16.msra.mxu0 0
    %539 = vmatprep.subr.bf16.mxu0 0
    %540 = vmatpush2.bf16.msra.mxu0 0
    %541 = vmatprep.subr.bf16.mxu0 0
    %542 = vmatpush2.bf16.msra.mxu0 0
    %543 = vmatprep.subr.bf16.mxu0 0
    %544 = vmatpush2.bf16.msra.mxu0 0
    %545 = vmatprep.subr.bf16.mxu0 0
    %546 = vmatpush2.bf16.msra.mxu0 0
    %547 = vmatprep.subr.bf16.mxu0 0
    %548 = vmatpush2.bf16.msra.mxu0 0
    %549 = vmatprep.subr.bf16.mxu0 0
    %550 = vmatpush2.bf16.msra.mxu0 0
    %551 = vmatprep.mubr.bf16.mxu0 0
    %552 = vmatmul.mubr.bf16.gmra.mxu0 %v477
    %v553 = vpop.f32.mrf.mxu0
    %v554 = vadd.f32 0.0, %v553
    %v555 = vpop.f32.mrf.mxu0
    %v556 = vpop.f32.mrf.mxu0
    %v557 = vpop.f32.mrf.mxu0
    %558 = vdwg.mxu0
    %v559 = vadd.f32 %v474, %v513
    %v560 = vxor.u32 %v559, 2147483648
    %v561 = vmul.f32 %v560, 1.442695
    %v562 = vpow.pop %v561
    %v563 = vadd.f32 %v562, 1.0
    %v564 = vrcp.pop %v563
    %v565 = vmul.f32 1.0, %v564
    %v566 = vadd.f32 %v475, %v515
    %v567 = vxor.u32 %v566, 2147483648
    %v568 = vmul.f32 %v567, 1.442695
    %v569 = vpow.pop %v568
    %v570 = vadd.f32 %v569, 1.0
    %v571 = vrcp.pop %v570
    %v572 = vmul.f32 1.0, %v571
    %v573 = vadd.f32 %v554, %v105
    %v574 = vmul.f32 %v565, %v573
    %v575 = vadd.f32 %v476, %v574
    %v576 = vtanh.pop %v575
    %v577 = vsub.f32 1.0, %v572
    %v578 = vmul.f32 %v577, %v576
    %v579 = vmul.f32 %v572, %v470
    %v580 = vadd.f32 %v578, %v579
    %s581 = sadd.s32 %s107, 2
    %p582 = scmp.lt.s32.totalorder %s581, 8
    %s583 = scalar_select %p582, 1, 0
    %s584 = scvt.s32.f32 %s583
    %v585 = vsub.f32 %v580, %v470
    %v586 = vstv %s584
    %v587 = vmul.f32 %v586, %v585
    %v588 = vadd.f32 %v470, %v587
    %s589 = scalar_lea.vmem [#allocation3], 36
    %v590 = vld [vmem:[%s589] sm:$0xff]
    %v591 = vld [vmem:[%s589 + $0x8] sm:$0xf]
    %v592 = vunpack.c.l.bf16 %v590
    %v593 = vunpack.c.h.bf16 %v590
    %v594 = vunpack.c.l.bf16 %v591
    %v595 = vpack.c.bf16 %v588, %v588
    %596 = vmatprep.subr.bf16.mxu0 %v217
    %597 = vmatpush1.bf16.msra.mxu0 %v216
    %598 = vmatprep.subr.bf16.mxu0 %v214
    %599 = vmatpush1.bf16.msra.mxu0 %v213
    %600 = vmatprep.subr.bf16.mxu0 %v211
    %601 = vmatpush1.bf16.msra.mxu0 %v210
    %602 = vmatprep.subr.bf16.mxu0 %v208
    %603 = vmatpush1.bf16.msra.mxu0 %v207
    %604 = vmatprep.subr.bf16.mxu0 %v205
    %605 = vmatpush1.bf16.msra.mxu0 %v204
    %606 = vmatprep.subr.bf16.mxu0 %v202
    %607 = vmatpush1.bf16.msra.mxu0 %v201
    %608 = vmatprep.subr.bf16.mxu0 %v199
    %609 = vmatpush1.bf16.msra.mxu0 %v198
    %610 = vmatprep.subr.bf16.mxu0 %v196
    %611 = vmatpush1.bf16.msra.mxu0 %v195
    %612 = vmatprep.subr.bf16.mxu0 0
    %613 = vmatpush2.bf16.msra.mxu0 0
    %614 = vmatprep.subr.bf16.mxu0 0
    %615 = vmatpush2.bf16.msra.mxu0 0
    %616 = vmatprep.subr.bf16.mxu0 0
    %617 = vmatpush2.bf16.msra.mxu0 0
    %618 = vmatprep.subr.bf16.mxu0 0
    %619 = vmatpush2.bf16.msra.mxu0 0
    %620 = vmatprep.subr.bf16.mxu0 0
    %621 = vmatpush2.bf16.msra.mxu0 0
    %622 = vmatprep.subr.bf16.mxu0 0
    %623 = vmatpush2.bf16.msra.mxu0 0
    %624 = vmatprep.subr.bf16.mxu0 0
    %625 = vmatpush2.bf16.msra.mxu0 0
    %626 = vmatprep.subr.bf16.mxu0 0
    %627 = vmatpush2.bf16.msra.mxu0 0
    %628 = vmatprep.mubr.bf16.mxu0 0
    %629 = vmatmul.mubr.bf16.gmra.mxu0 %v595
    %v630 = vpop.f32.mrf.mxu0
    %v631 = vadd.f32 0.0, %v630
    %v632 = vpop.f32.mrf.mxu0
    %v633 = vadd.f32 0.0, %v632
    %v634 = vpop.f32.mrf.mxu0
    %v635 = vpop.f32.mrf.mxu0
    %636 = vdwg.mxu0
    %637 = vmatprep.subr.bf16.mxu0 0
    %638 = vmatpush1.bf16.msra.mxu0 %v218
    %639 = vmatprep.subr.bf16.mxu0 0
    %640 = vmatpush1.bf16.msra.mxu0 %v215
    %641 = vmatprep.subr.bf16.mxu0 0
    %642 = vmatpush1.bf16.msra.mxu0 %v212
    %643 = vmatprep.subr.bf16.mxu0 0
    %644 = vmatpush1.bf16.msra.mxu0 %v209
    %645 = vmatprep.subr.bf16.mxu0 0
    %646 = vmatpush1.bf16.msra.mxu0 %v206
    %647 = vmatprep.subr.bf16.mxu0 0
    %648 = vmatpush1.bf16.msra.mxu0 %v203
    %649 = vmatprep.subr.bf16.mxu0 0
    %650 = vmatpush1.bf16.msra.mxu0 %v200
    %651 = vmatprep.subr.bf16.mxu0 0
    %652 = vmatpush1.bf16.msra.mxu0 %v197
    %653 = vmatprep.subr.bf16.mxu0 0
    %654 = vmatpush2.bf16.msra.mxu0 0
    %655 = vmatprep.subr.bf16.mxu0 0
    %656 = vmatpush2.bf16.msra.mxu0 0
    %657 = vmatprep.subr.bf16.mxu0 0
    %658 = vmatpush2.bf16.msra.mxu0 0
    %659 = vmatprep.subr.bf16.mxu0 0
    %660 = vmatpush2.bf16.msra.mxu0 0
    %661 = vmatprep.subr.bf16.mxu0 0
    %662 = vmatpush2.bf16.msra.mxu0 0
    %663 = vmatprep.subr.bf16.mxu0 0
    %664 = vmatpush2.bf16.msra.mxu0 0
    %665 = vmatprep.subr.bf16.mxu0 0
    %666 = vmatpush2.bf16.msra.mxu0 0
    %667 = vmatprep.subr.bf16.mxu0 0
    %668 = vmatpush2.bf16.msra.mxu0 0
    %669 = vmatprep.mubr.bf16.mxu0 0
    %670 = vmatmul.mubr.bf16.gmra.mxu0 %v595
    %v671 = vpop.f32.mrf.mxu0
    %v672 = vadd.f32 0.0, %v671
    %v673 = vpop.f32.mrf.mxu0
    %v674 = vpop.f32.mrf.mxu0
    %v675 = vpop.f32.mrf.mxu0
    %676 = vdwg.mxu0
    %v677 = vadd.f32 %v592, %v631
    %v678 = vxor.u32 %v677, 2147483648
    %v679 = vmul.f32 %v678, 1.442695
    %v680 = vpow.pop %v679
    %v681 = vadd.f32 %v680, 1.0
    %v682 = vrcp.pop %v681
    %v683 = vmul.f32 1.0, %v682
    %v684 = vadd.f32 %v593, %v633
    %v685 = vxor.u32 %v684, 2147483648
    %v686 = vmul.f32 %v685, 1.442695
    %v687 = vpow.pop %v686
    %v688 = vadd.f32 %v687, 1.0
    %v689 = vrcp.pop %v688
    %v690 = vmul.f32 1.0, %v689
    %v691 = vadd.f32 %v672, %v105
    %v692 = vmul.f32 %v683, %v691
    %v693 = vadd.f32 %v594, %v692
    %v694 = vtanh.pop %v693
    %v695 = vsub.f32 1.0, %v690
    %v696 = vmul.f32 %v695, %v694
    %v697 = vmul.f32 %v690, %v588
    %v698 = vadd.f32 %v696, %v697
    %s699 = sadd.s32 %s107, 3
    %p700 = scmp.lt.s32.totalorder %s699, 8
    %s701 = scalar_select %p700, 1, 0
    %s702 = scvt.s32.f32 %s701
    %v703 = vsub.f32 %v698, %v588
    %v704 = vstv %s702
    %v705 = vmul.f32 %v704, %v703
    %v706 = vadd.f32 %v588, %v705
    %s707 = scalar_lea.vmem [#allocation3], 48
    %v708 = vld [vmem:[%s707] sm:$0xff]
    %v709 = vld [vmem:[%s707 + $0x8] sm:$0xf]
    %v710 = vunpack.c.l.bf16 %v708
    %v711 = vunpack.c.h.bf16 %v708
    %v712 = vunpack.c.l.bf16 %v709
    %v713 = vpack.c.bf16 %v706, %v706
    %714 = vmatprep.subr.bf16.mxu0 %v217
    %715 = vmatpush1.bf16.msra.mxu0 %v216
    %716 = vmatprep.subr.bf16.mxu0 %v214
    %717 = vmatpush1.bf16.msra.mxu0 %v213
    %718 = vmatprep.subr.bf16.mxu0 %v211
    %719 = vmatpush1.bf16.msra.mxu0 %v210
    %720 = vmatprep.subr.bf16.mxu0 %v208
    %721 = vmatpush1.bf16.msra.mxu0 %v207
    %722 = vmatprep.subr.bf16.mxu0 %v205
    %723 = vmatpush1.bf16.msra.mxu0 %v204
    %724 = vmatprep.subr.bf16.mxu0 %v202
    %725 = vmatpush1.bf16.msra.mxu0 %v201
    %726 = vmatprep.subr.bf16.mxu0 %v199
    %727 = vmatpush1.bf16.msra.mxu0 %v198
    %728 = vmatprep.subr.bf16.mxu0 %v196
    %729 = vmatpush1.bf16.msra.mxu0 %v195
    %730 = vmatprep.subr.bf16.mxu0 0
    %731 = vmatpush2.bf16.msra.mxu0 0
    %732 = vmatprep.subr.bf16.mxu0 0
    %733 = vmatpush2.bf16.msra.mxu0 0
    %734 = vmatprep.subr.bf16.mxu0 0
    %735 = vmatpush2.bf16.msra.mxu0 0
    %736 = vmatprep.subr.bf16.mxu0 0
    %737 = vmatpush2.bf16.msra.mxu0 0
    %738 = vmatprep.subr.bf16.mxu0 0
    %739 = vmatpush2.bf16.msra.mxu0 0
    %740 = vmatprep.subr.bf16.mxu0 0
    %741 = vmatpush2.bf16.msra.mxu0 0
    %742 = vmatprep.subr.bf16.mxu0 0
    %743 = vmatpush2.bf16.msra.mxu0 0
    %744 = vmatprep.subr.bf16.mxu0 0
    %745 = vmatpush2.bf16.msra.mxu0 0
    %746 = vmatprep.mubr.bf16.mxu0 0
    %747 = vmatmul.mubr.bf16.gmra.mxu0 %v713
    %v748 = vpop.f32.mrf.mxu0
    %v749 = vadd.f32 0.0, %v748
    %v750 = vpop.f32.mrf.mxu0
    %v751 = vadd.f32 0.0, %v750
    %v752 = vpop.f32.mrf.mxu0
    %v753 = vpop.f32.mrf.mxu0
    %754 = vdwg.mxu0
    %755 = vmatprep.subr.bf16.mxu0 0
    %756 = vmatpush1.bf16.msra.mxu0 %v218
    %757 = vmatprep.subr.bf16.mxu0 0
    %758 = vmatpush1.bf16.msra.mxu0 %v215
    %759 = vmatprep.subr.bf16.mxu0 0
    %760 = vmatpush1.bf16.msra.mxu0 %v212
    %761 = vmatprep.subr.bf16.mxu0 0
    %762 = vmatpush1.bf16.msra.mxu0 %v209
    %763 = vmatprep.subr.bf16.mxu0 0
    %764 = vmatpush1.bf16.msra.mxu0 %v206
    %765 = vmatprep.subr.bf16.mxu0 0
    %766 = vmatpush1.bf16.msra.mxu0 %v203
    %767 = vmatprep.subr.bf16.mxu0 0
    %768 = vmatpush1.bf16.msra.mxu0 %v200
    %769 = vmatprep.subr.bf16.mxu0 0
    %770 = vmatpush1.bf16.msra.mxu0 %v197
    %771 = vmatprep.subr.bf16.mxu0 0
    %772 = vmatpush2.bf16.msra.mxu0 0
    %773 = vmatprep.subr.bf16.mxu0 0
    %774 = vmatpush2.bf16.msra.mxu0 0
    %775 = vmatprep.subr.bf16.mxu0 0
    %776 = vmatpush2.bf16.msra.mxu0 0
    %777 = vmatprep.subr.bf16.mxu0 0
    %778 = vmatpush2.bf16.msra.mxu0 0
    %779 = vmatprep.subr.bf16.mxu0 0
    %780 = vmatpush2.bf16.msra.mxu0 0
    %781 = vmatprep.subr.bf16.mxu0 0
    %782 = vmatpush2.bf16.msra.mxu0 0
    %783 = vmatprep.subr.bf16.mxu0 0
    %784 = vmatpush2.bf16.msra.mxu0 0
    %785 = vmatprep.subr.bf16.mxu0 0
    %786 = vmatpush2.bf16.msra.mxu0 0
    %787 = vmatprep.mubr.bf16.mxu0 0
    %788 = vmatmul.mubr.bf16.gmra.mxu0 %v713
    %v789 = vpop.f32.mrf.mxu0
    %v790 = vadd.f32 0.0, %v789
    %v791 = vpop.f32.mrf.mxu0
    %v792 = vpop.f32.mrf.mxu0
    %v793 = vpop.f32.mrf.mxu0
    %794 = vdwg.mxu0
    %v795 = vadd.f32 %v710, %v749
    %v796 = vxor.u32 %v795, 2147483648
    %v797 = vmul.f32 %v796, 1.442695
    %v798 = vpow.pop %v797
    %v799 = vadd.f32 %v798, 1.0
    %v800 = vrcp.pop %v799
    %v801 = vmul.f32 1.0, %v800
    %v802 = vadd.f32 %v711, %v751
    %v803 = vxor.u32 %v802, 2147483648
    %v804 = vmul.f32 %v803, 1.442695
    %v805 = vpow.pop %v804
    %v806 = vadd.f32 %v805, 1.0
    %v807 = vrcp.pop %v806
    %v808 = vmul.f32 1.0, %v807
    %v809 = vadd.f32 %v790, %v105
    %v810 = vmul.f32 %v801, %v809
    %v811 = vadd.f32 %v712, %v810
    %v812 = vtanh.pop %v811
    %v813 = vsub.f32 1.0, %v808
    %v814 = vmul.f32 %v813, %v812
    %v815 = vmul.f32 %v808, %v706
    %v816 = vadd.f32 %v814, %v815
    %s817 = sadd.s32 %s107, 4
    %p818 = scmp.lt.s32.totalorder %s817, 8
    %s819 = scalar_select %p818, 1, 0
    %s820 = scvt.s32.f32 %s819
    %v821 = vsub.f32 %v816, %v706
    %v822 = vstv %s820
    %v823 = vmul.f32 %v822, %v821
    %v824 = vadd.f32 %v706, %v823
    %s825 = scalar_lea.vmem [#allocation3], 60
    %v826 = vld [vmem:[%s825] sm:$0xff]
    %v827 = vld [vmem:[%s825 + $0x8] sm:$0xf]
    %v828 = vunpack.c.l.bf16 %v826
    %v829 = vunpack.c.h.bf16 %v826
    %v830 = vunpack.c.l.bf16 %v827
    %v831 = vpack.c.bf16 %v824, %v824
    %832 = vmatprep.subr.bf16.mxu0 %v217
    %833 = vmatpush1.bf16.msra.mxu0 %v216
    %834 = vmatprep.subr.bf16.mxu0 %v214
    %835 = vmatpush1.bf16.msra.mxu0 %v213
    %836 = vmatprep.subr.bf16.mxu0 %v211
    %837 = vmatpush1.bf16.msra.mxu0 %v210
    %838 = vmatprep.subr.bf16.mxu0 %v208
    %839 = vmatpush1.bf16.msra.mxu0 %v207
    %840 = vmatprep.subr.bf16.mxu0 %v205
    %841 = vmatpush1.bf16.msra.mxu0 %v204
    %842 = vmatprep.subr.bf16.mxu0 %v202
    %843 = vmatpush1.bf16.msra.mxu0 %v201
    %844 = vmatprep.subr.bf16.mxu0 %v199
    %845 = vmatpush1.bf16.msra.mxu0 %v198
    %846 = vmatprep.subr.bf16.mxu0 %v196
    %847 = vmatpush1.bf16.msra.mxu0 %v195
    %848 = vmatprep.subr.bf16.mxu0 0
    %849 = vmatpush2.bf16.msra.mxu0 0
    %850 = vmatprep.subr.bf16.mxu0 0
    %851 = vmatpush2.bf16.msra.mxu0 0
    %852 = vmatprep.subr.bf16.mxu0 0
    %853 = vmatpush2.bf16.msra.mxu0 0
    %854 = vmatprep.subr.bf16.mxu0 0
    %855 = vmatpush2.bf16.msra.mxu0 0
    %856 = vmatprep.subr.bf16.mxu0 0
    %857 = vmatpush2.bf16.msra.mxu0 0
    %858 = vmatprep.subr.bf16.mxu0 0
    %859 = vmatpush2.bf16.msra.mxu0 0
    %860 = vmatprep.subr.bf16.mxu0 0
    %861 = vmatpush2.bf16.msra.mxu0 0
    %862 = vmatprep.subr.bf16.mxu0 0
    %863 = vmatpush2.bf16.msra.mxu0 0
    %864 = vmatprep.mubr.bf16.mxu0 0
    %865 = vmatmul.mubr.bf16.gmra.mxu0 %v831
    %v866 = vpop.f32.mrf.mxu0
    %v867 = vadd.f32 0.0, %v866
    %v868 = vpop.f32.mrf.mxu0
    %v869 = vadd.f32 0.0, %v868
    %v870 = vpop.f32.mrf.mxu0
    %v871 = vpop.f32.mrf.mxu0
    %872 = vdwg.mxu0
    %873 = vmatprep.subr.bf16.mxu0 0
    %874 = vmatpush1.bf16.msra.mxu0 %v218
    %875 = vmatprep.subr.bf16.mxu0 0
    %876 = vmatpush1.bf16.msra.mxu0 %v215
    %877 = vmatprep.subr.bf16.mxu0 0
    %878 = vmatpush1.bf16.msra.mxu0 %v212
    %879 = vmatprep.subr.bf16.mxu0 0
    %880 = vmatpush1.bf16.msra.mxu0 %v209
    %881 = vmatprep.subr.bf16.mxu0 0
    %882 = vmatpush1.bf16.msra.mxu0 %v206
    %883 = vmatprep.subr.bf16.mxu0 0
    %884 = vmatpush1.bf16.msra.mxu0 %v203
    %885 = vmatprep.subr.bf16.mxu0 0
    %886 = vmatpush1.bf16.msra.mxu0 %v200
    %887 = vmatprep.subr.bf16.mxu0 0
    %888 = vmatpush1.bf16.msra.mxu0 %v197
    %889 = vmatprep.subr.bf16.mxu0 0
    %890 = vmatpush2.bf16.msra.mxu0 0
    %891 = vmatprep.subr.bf16.mxu0 0
    %892 = vmatpush2.bf16.msra.mxu0 0
    %893 = vmatprep.subr.bf16.mxu0 0
    %894 = vmatpush2.bf16.msra.mxu0 0
    %895 = vmatprep.subr.bf16.mxu0 0
    %896 = vmatpush2.bf16.msra.mxu0 0
    %897 = vmatprep.subr.bf16.mxu0 0
    %898 = vmatpush2.bf16.msra.mxu0 0
    %899 = vmatprep.subr.bf16.mxu0 0
    %900 = vmatpush2.bf16.msra.mxu0 0
    %901 = vmatprep.subr.bf16.mxu0 0
    %902 = vmatpush2.bf16.msra.mxu0 0
    %903 = vmatprep.subr.bf16.mxu0 0
    %904 = vmatpush2.bf16.msra.mxu0 0
    %905 = vmatprep.mubr.bf16.mxu0 0
    %906 = vmatmul.mubr.bf16.gmra.mxu0 %v831
    %v907 = vpop.f32.mrf.mxu0
    %v908 = vadd.f32 0.0, %v907
    %v909 = vpop.f32.mrf.mxu0
    %v910 = vpop.f32.mrf.mxu0
    %v911 = vpop.f32.mrf.mxu0
    %912 = vdwg.mxu0
    %v913 = vadd.f32 %v828, %v867
    %v914 = vxor.u32 %v913, 2147483648
    %v915 = vmul.f32 %v914, 1.442695
    %v916 = vpow.pop %v915
    %v917 = vadd.f32 %v916, 1.0
    %v918 = vrcp.pop %v917
    %v919 = vmul.f32 1.0, %v918
    %v920 = vadd.f32 %v829, %v869
    %v921 = vxor.u32 %v920, 2147483648
    %v922 = vmul.f32 %v921, 1.442695
    %v923 = vpow.pop %v922
    %v924 = vadd.f32 %v923, 1.0
    %v925 = vrcp.pop %v924
    %v926 = vmul.f32 1.0, %v925
    %v927 = vadd.f32 %v908, %v105
    %v928 = vmul.f32 %v919, %v927
    %v929 = vadd.f32 %v830, %v928
    %v930 = vtanh.pop %v929
    %v931 = vsub.f32 1.0, %v926
    %v932 = vmul.f32 %v931, %v930
    %v933 = vmul.f32 %v926, %v824
    %v934 = vadd.f32 %v932, %v933
    %s935 = sadd.s32 %s107, 5
    %p936 = scmp.lt.s32.totalorder %s935, 8
    %s937 = scalar_select %p936, 1, 0
    %s938 = scvt.s32.f32 %s937
    %v939 = vsub.f32 %v934, %v824
    %v940 = vstv %s938
    %v941 = vmul.f32 %v940, %v939
    %v942 = vadd.f32 %v824, %v941
    %s943 = scalar_lea.vmem [#allocation3], 72
    %v944 = vld [vmem:[%s943] sm:$0xff]
    %v945 = vld [vmem:[%s943 + $0x8] sm:$0xf]
    %v946 = vunpack.c.l.bf16 %v944
    %v947 = vunpack.c.h.bf16 %v944
    %v948 = vunpack.c.l.bf16 %v945
    %v949 = vpack.c.bf16 %v942, %v942
    %950 = vmatprep.subr.bf16.mxu0 %v217
    %951 = vmatpush1.bf16.msra.mxu0 %v216
    %952 = vmatprep.subr.bf16.mxu0 %v214
    %953 = vmatpush1.bf16.msra.mxu0 %v213
    %954 = vmatprep.subr.bf16.mxu0 %v211
    %955 = vmatpush1.bf16.msra.mxu0 %v210
    %956 = vmatprep.subr.bf16.mxu0 %v208
    %957 = vmatpush1.bf16.msra.mxu0 %v207
    %958 = vmatprep.subr.bf16.mxu0 %v205
    %959 = vmatpush1.bf16.msra.mxu0 %v204
    %960 = vmatprep.subr.bf16.mxu0 %v202
    %961 = vmatpush1.bf16.msra.mxu0 %v201
    %962 = vmatprep.subr.bf16.mxu0 %v199
    %963 = vmatpush1.bf16.msra.mxu0 %v198
    %964 = vmatprep.subr.bf16.mxu0 %v196
    %965 = vmatpush1.bf16.msra.mxu0 %v195
    %966 = vmatprep.subr.bf16.mxu0 0
    %967 = vmatpush2.bf16.msra.mxu0 0
    %968 = vmatprep.subr.bf16.mxu0 0
    %969 = vmatpush2.bf16.msra.mxu0 0
    %970 = vmatprep.subr.bf16.mxu0 0
    %971 = vmatpush2.bf16.msra.mxu0 0
    %972 = vmatprep.subr.bf16.mxu0 0
    %973 = vmatpush2.bf16.msra.mxu0 0
    %974 = vmatprep.subr.bf16.mxu0 0
    %975 = vmatpush2.bf16.msra.mxu0 0
    %976 = vmatprep.subr.bf16.mxu0 0
    %977 = vmatpush2.bf16.msra.mxu0 0
    %978 = vmatprep.subr.bf16.mxu0 0
    %979 = vmatpush2.bf16.msra.mxu0 0
    %980 = vmatprep.subr.bf16.mxu0 0
    %981 = vmatpush2.bf16.msra.mxu0 0
    %982 = vmatprep.mubr.bf16.mxu0 0
    %983 = vmatmul.mubr.bf16.gmra.mxu0 %v949
    %v984 = vpop.f32.mrf.mxu0
    %v985 = vadd.f32 0.0, %v984
    %v986 = vpop.f32.mrf.mxu0
    %v987 = vadd.f32 0.0, %v986
    %v988 = vpop.f32.mrf.mxu0
    %v989 = vpop.f32.mrf.mxu0
    %990 = vdwg.mxu0
    %991 = vmatprep.subr.bf16.mxu0 0
    %992 = vmatpush1.bf16.msra.mxu0 %v218
    %993 = vmatprep.subr.bf16.mxu0 0
    %994 = vmatpush1.bf16.msra.mxu0 %v215
    %995 = vmatprep.subr.bf16.mxu0 0
    %996 = vmatpush1.bf16.msra.mxu0 %v212
    %997 = vmatprep.subr.bf16.mxu0 0
    %998 = vmatpush1.bf16.msra.mxu0 %v209
    %999 = vmatprep.subr.bf16.mxu0 0
    %1000 = vmatpush1.bf16.msra.mxu0 %v206
    %1001 = vmatprep.subr.bf16.mxu0 0
    %1002 = vmatpush1.bf16.msra.mxu0 %v203
    %1003 = vmatprep.subr.bf16.mxu0 0
    %1004 = vmatpush1.bf16.msra.mxu0 %v200
    %1005 = vmatprep.subr.bf16.mxu0 0
    %1006 = vmatpush1.bf16.msra.mxu0 %v197
    %1007 = vmatprep.subr.bf16.mxu0 0
    %1008 = vmatpush2.bf16.msra.mxu0 0
    %1009 = vmatprep.subr.bf16.mxu0 0
    %1010 = vmatpush2.bf16.msra.mxu0 0
    %1011 = vmatprep.subr.bf16.mxu0 0
    %1012 = vmatpush2.bf16.msra.mxu0 0
    %1013 = vmatprep.subr.bf16.mxu0 0
    %1014 = vmatpush2.bf16.msra.mxu0 0
    %1015 = vmatprep.subr.bf16.mxu0 0
    %1016 = vmatpush2.bf16.msra.mxu0 0
    %1017 = vmatprep.subr.bf16.mxu0 0
    %1018 = vmatpush2.bf16.msra.mxu0 0
    %1019 = vmatprep.subr.bf16.mxu0 0
    %1020 = vmatpush2.bf16.msra.mxu0 0
    %1021 = vmatprep.subr.bf16.mxu0 0
    %1022 = vmatpush2.bf16.msra.mxu0 0
    %1023 = vmatprep.mubr.bf16.mxu0 0
    %1024 = vmatmul.mubr.bf16.gmra.mxu0 %v949
    %v1025 = vpop.f32.mrf.mxu0
    %v1026 = vadd.f32 0.0, %v1025
    %v1027 = vpop.f32.mrf.mxu0
    %v1028 = vpop.f32.mrf.mxu0
    %v1029 = vpop.f32.mrf.mxu0
    %1030 = vdwg.mxu0
    %v1031 = vadd.f32 %v946, %v985
    %v1032 = vxor.u32 %v1031, 2147483648
    %v1033 = vmul.f32 %v1032, 1.442695
    %v1034 = vpow.pop %v1033
    %v1035 = vadd.f32 %v1034, 1.0
    %v1036 = vrcp.pop %v1035
    %v1037 = vmul.f32 1.0, %v1036
    %v1038 = vadd.f32 %v947, %v987
    %v1039 = vxor.u32 %v1038, 2147483648
    %v1040 = vmul.f32 %v1039, 1.442695
    %v1041 = vpow.pop %v1040
    %v1042 = vadd.f32 %v1041, 1.0
    %v1043 = vrcp.pop %v1042
    %v1044 = vmul.f32 1.0, %v1043
    %v1045 = vadd.f32 %v1026, %v105
    %v1046 = vmul.f32 %v1037, %v1045
    %v1047 = vadd.f32 %v948, %v1046
    %v1048 = vtanh.pop %v1047
    %v1049 = vsub.f32 1.0, %v1044
    %v1050 = vmul.f32 %v1049, %v1048
    %v1051 = vmul.f32 %v1044, %v942
    %v1052 = vadd.f32 %v1050, %v1051
    %s1053 = sadd.s32 %s107, 6
    %p1054 = scmp.lt.s32.totalorder %s1053, 8
    %s1055 = scalar_select %p1054, 1, 0
    %s1056 = scvt.s32.f32 %s1055
    %v1057 = vsub.f32 %v1052, %v942
    %v1058 = vstv %s1056
    %v1059 = vmul.f32 %v1058, %v1057
    %v1060 = vadd.f32 %v942, %v1059
    %s1061 = scalar_lea.vmem [#allocation3], 84
    %v1062 = vld [vmem:[%s1061] sm:$0xff]
    %v1063 = vld [vmem:[%s1061 + $0x8] sm:$0xf]
    %v1064 = vunpack.c.l.bf16 %v1062
    %v1065 = vunpack.c.h.bf16 %v1062
    %v1066 = vunpack.c.l.bf16 %v1063
    %v1067 = vpack.c.bf16 %v1060, %v1060
    %1068 = vmatprep.subr.bf16.mxu0 %v217
    %1069 = vmatpush1.bf16.msra.mxu0 %v216
    %1070 = vmatprep.subr.bf16.mxu0 %v214
    %1071 = vmatpush1.bf16.msra.mxu0 %v213
    %1072 = vmatprep.subr.bf16.mxu0 %v211
    %1073 = vmatpush1.bf16.msra.mxu0 %v210
    %1074 = vmatprep.subr.bf16.mxu0 %v208
    %1075 = vmatpush1.bf16.msra.mxu0 %v207
    %1076 = vmatprep.subr.bf16.mxu0 %v205
    %1077 = vmatpush1.bf16.msra.mxu0 %v204
    %1078 = vmatprep.subr.bf16.mxu0 %v202
    %1079 = vmatpush1.bf16.msra.mxu0 %v201
    %1080 = vmatprep.subr.bf16.mxu0 %v199
    %1081 = vmatpush1.bf16.msra.mxu0 %v198
    %1082 = vmatprep.subr.bf16.mxu0 %v196
    %1083 = vmatpush1.bf16.msra.mxu0 %v195
    %1084 = vmatprep.subr.bf16.mxu0 0
    %1085 = vmatpush2.bf16.msra.mxu0 0
    %1086 = vmatprep.subr.bf16.mxu0 0
    %1087 = vmatpush2.bf16.msra.mxu0 0
    %1088 = vmatprep.subr.bf16.mxu0 0
    %1089 = vmatpush2.bf16.msra.mxu0 0
    %1090 = vmatprep.subr.bf16.mxu0 0
    %1091 = vmatpush2.bf16.msra.mxu0 0
    %1092 = vmatprep.subr.bf16.mxu0 0
    %1093 = vmatpush2.bf16.msra.mxu0 0
    %1094 = vmatprep.subr.bf16.mxu0 0
    %1095 = vmatpush2.bf16.msra.mxu0 0
    %1096 = vmatprep.subr.bf16.mxu0 0
    %1097 = vmatpush2.bf16.msra.mxu0 0
    %1098 = vmatprep.subr.bf16.mxu0 0
    %1099 = vmatpush2.bf16.msra.mxu0 0
    %1100 = vmatprep.mubr.bf16.mxu0 0
    %1101 = vmatmul.mubr.bf16.gmra.mxu0 %v1067
    %v1102 = vpop.f32.mrf.mxu0
    %v1103 = vadd.f32 0.0, %v1102
    %v1104 = vpop.f32.mrf.mxu0
    %v1105 = vadd.f32 0.0, %v1104
    %v1106 = vpop.f32.mrf.mxu0
    %v1107 = vpop.f32.mrf.mxu0
    %1108 = vdwg.mxu0
    %1109 = vmatprep.subr.bf16.mxu0 0
    %1110 = vmatpush1.bf16.msra.mxu0 %v218
    %1111 = vmatprep.subr.bf16.mxu0 0
    %1112 = vmatpush1.bf16.msra.mxu0 %v215
    %1113 = vmatprep.subr.bf16.mxu0 0
    %1114 = vmatpush1.bf16.msra.mxu0 %v212
    %1115 = vmatprep.subr.bf16.mxu0 0
    %1116 = vmatpush1.bf16.msra.mxu0 %v209
    %1117 = vmatprep.subr.bf16.mxu0 0
    %1118 = vmatpush1.bf16.msra.mxu0 %v206
    %1119 = vmatprep.subr.bf16.mxu0 0
    %1120 = vmatpush1.bf16.msra.mxu0 %v203
    %1121 = vmatprep.subr.bf16.mxu0 0
    %1122 = vmatpush1.bf16.msra.mxu0 %v200
    %1123 = vmatprep.subr.bf16.mxu0 0
    %1124 = vmatpush1.bf16.msra.mxu0 %v197
    %1125 = vmatprep.subr.bf16.mxu0 0
    %1126 = vmatpush2.bf16.msra.mxu0 0
    %1127 = vmatprep.subr.bf16.mxu0 0
    %1128 = vmatpush2.bf16.msra.mxu0 0
    %1129 = vmatprep.subr.bf16.mxu0 0
    %1130 = vmatpush2.bf16.msra.mxu0 0
    %1131 = vmatprep.subr.bf16.mxu0 0
    %1132 = vmatpush2.bf16.msra.mxu0 0
    %1133 = vmatprep.subr.bf16.mxu0 0
    %1134 = vmatpush2.bf16.msra.mxu0 0
    %1135 = vmatprep.subr.bf16.mxu0 0
    %1136 = vmatpush2.bf16.msra.mxu0 0
    %1137 = vmatprep.subr.bf16.mxu0 0
    %1138 = vmatpush2.bf16.msra.mxu0 0
    %1139 = vmatprep.subr.bf16.mxu0 0
    %1140 = vmatpush2.bf16.msra.mxu0 0
    %1141 = vmatprep.mubr.bf16.mxu0 0
    %1142 = vmatmul.mubr.bf16.gmra.mxu0 %v1067
    %v1143 = vpop.f32.mrf.mxu0
    %v1144 = vadd.f32 0.0, %v1143
    %v1145 = vpop.f32.mrf.mxu0
    %v1146 = vpop.f32.mrf.mxu0
    %v1147 = vpop.f32.mrf.mxu0
    %1148 = vdwg.mxu0
    %v1149 = vadd.f32 %v1064, %v1103
    %v1150 = vxor.u32 %v1149, 2147483648
    %v1151 = vmul.f32 %v1150, 1.442695
    %v1152 = vpow.pop %v1151
    %v1153 = vadd.f32 %v1152, 1.0
    %v1154 = vrcp.pop %v1153
    %v1155 = vmul.f32 1.0, %v1154
    %v1156 = vadd.f32 %v1065, %v1105
    %v1157 = vxor.u32 %v1156, 2147483648
    %v1158 = vmul.f32 %v1157, 1.442695
    %v1159 = vpow.pop %v1158
    %v1160 = vadd.f32 %v1159, 1.0
    %v1161 = vrcp.pop %v1160
    %v1162 = vmul.f32 1.0, %v1161
    %v1163 = vadd.f32 %v1144, %v105
    %v1164 = vmul.f32 %v1155, %v1163
    %v1165 = vadd.f32 %v1066, %v1164
    %v1166 = vtanh.pop %v1165
    %v1167 = vsub.f32 1.0, %v1162
    %v1168 = vmul.f32 %v1167, %v1166
    %v1169 = vmul.f32 %v1162, %v1060
    %v1170 = vadd.f32 %v1168, %v1169
    %s1171 = sadd.s32 %s107, 7
    %p1172 = scmp.lt.s32.totalorder %s1171, 8
    %s1173 = scalar_select %p1172, 1, 0
    %s1174 = scvt.s32.f32 %s1173
    %v1175 = vsub.f32 %v1170, %v1060
    %v1176 = vstv %s1174
    %v1177 = vmul.f32 %v1176, %v1175
    %v1178 = vadd.f32 %v1060, %v1177
    %1179 = vst [vmem:[#allocation2] sm:$0xff] %v1178
    // Predicated region
    $region38: #{tpu_custom_call.1} parent=1 // pred_check
      %p1180 = pneg %p63
    $region39: #{tpu_custom_call.1} parent=1 // pred_check_branch
      %1182 = sbr.rel (%p1180) target = $region41
    $region40: #{tpu_custom_call.1} parent=1 // pred_region
      %v1183 = vpack.c.bf16 %v1178, %v1178
      %v1184 = vld [vmem:[#allocation8] sm:$0xf]
      %v1185 = vld [vmem:[#allocation8 + $0x4] sm:$0xf]
      %v1186 = vld [vmem:[#allocation8 + $0x8] sm:$0xf]
      %v1187 = vld [vmem:[#allocation8 + $0xc] sm:$0xf]
      %v1188 = vld [vmem:[#allocation8 + $0x10] sm:$0xf]
      %v1189 = vld [vmem:[#allocation8 + $0x14] sm:$0xf]
      %v1190 = vld [vmem:[#allocation8 + $0x18] sm:$0xf]
      %v1191 = vld [vmem:[#allocation8 + $0x1c] sm:$0xf]
      %v1192 = vld [vmem:[#allocation8 + $0x20] sm:$0xf]
      %v1193 = vld [vmem:[#allocation8 + $0x24] sm:$0xf]
      %v1194 = vld [vmem:[#allocation8 + $0x28] sm:$0xf]
      %v1195 = vld [vmem:[#allocation8 + $0x2c] sm:$0xf]
      %v1196 = vld [vmem:[#allocation8 + $0x30] sm:$0xf]
      %v1197 = vld [vmem:[#allocation8 + $0x34] sm:$0xf]
      %v1198 = vld [vmem:[#allocation8 + $0x38] sm:$0xf]
      %v1199 = vld [vmem:[#allocation8 + $0x3c] sm:$0xf]
      %v1200 = vld [vmem:[%s4] sm:$0x1]
      %v1202 = vlaneseq
      %v1203 = vshrl.u32 %v1202, 7
      %v1204 = vsub.s32 0, %v1203
      %v1205 = vrot.slane %v1200, %v1204
      %v1223 = vunpack.c.l.b16 %v1184
      %v1224 = vunpack.c.l.b16 %v1185
      %v1225 = vunpack.c.l.b16 %v1186
      %v1226 = vunpack.c.l.b16 %v1187
      %v1227 = vunpack.c.l.b16 %v1188
      %v1228 = vunpack.c.l.b16 %v1189
      %v1229 = vunpack.c.l.b16 %v1190
      %v1230 = vunpack.c.l.b16 %v1191
      %v1231 = vunpack.c.l.b16 %v1192
      %v1232 = vunpack.c.l.b16 %v1193
      %v1233 = vunpack.c.l.b16 %v1194
      %v1234 = vunpack.c.l.b16 %v1195
      %v1235 = vunpack.c.l.b16 %v1196
      %v1236 = vunpack.c.l.b16 %v1197
      %v1237 = vunpack.c.l.b16 %v1198
      %v1238 = vunpack.c.l.b16 %v1199
      %v1239 = vpack.c.b16 %v1224, %v1223
      %v1240 = vpack.c.b16 %v1226, %v1225
      %v1241 = vpack.c.b16 %v1228, %v1227
      %v1242 = vpack.c.b16 %v1230, %v1229
      %v1243 = vpack.c.b16 %v1232, %v1231
      %v1244 = vpack.c.b16 %v1234, %v1233
      %v1245 = vpack.c.b16 %v1236, %v1235
      %v1246 = vpack.c.b16 %v1238, %v1237
      %1255 = vmatprep.subr.bf16.mxu0 0
      %1256 = vmatpush1.bf16.msra.mxu0 %v1246
      %1257 = vmatprep.subr.bf16.mxu0 0
      %1258 = vmatpush1.bf16.msra.mxu0 %v1245
      %1259 = vmatprep.subr.bf16.mxu0 0
      %1260 = vmatpush1.bf16.msra.mxu0 %v1244
      %1261 = vmatprep.subr.bf16.mxu0 0
      %1262 = vmatpush1.bf16.msra.mxu0 %v1243
      %1263 = vmatprep.subr.bf16.mxu0 0
      %1264 = vmatpush1.bf16.msra.mxu0 %v1242
      %1265 = vmatprep.subr.bf16.mxu0 0
      %1266 = vmatpush1.bf16.msra.mxu0 %v1241
      %1267 = vmatprep.subr.bf16.mxu0 0
      %1268 = vmatpush1.bf16.msra.mxu0 %v1240
      %1269 = vmatprep.subr.bf16.mxu0 0
      %1270 = vmatpush1.bf16.msra.mxu0 %v1239
      %1271 = vmatprep.subr.bf16.mxu0 0
      %1272 = vmatpush2.bf16.msra.mxu0 0
      %1273 = vmatprep.subr.bf16.mxu0 0
      %1274 = vmatpush2.bf16.msra.mxu0 0
      %1275 = vmatprep.subr.bf16.mxu0 0
      %1276 = vmatpush2.bf16.msra.mxu0 0
      %1277 = vmatprep.subr.bf16.mxu0 0
      %1278 = vmatpush2.bf16.msra.mxu0 0
      %1279 = vmatprep.subr.bf16.mxu0 0
      %1280 = vmatpush2.bf16.msra.mxu0 0
      %1281 = vmatprep.subr.bf16.mxu0 0
      %1282 = vmatpush2.bf16.msra.mxu0 0
      %1283 = vmatprep.subr.bf16.mxu0 0
      %1284 = vmatpush2.bf16.msra.mxu0 0
      %1285 = vmatprep.subr.bf16.mxu0 0
      %1286 = vmatpush2.bf16.msra.mxu0 0
      %1287 = vmatprep.mubr.bf16.mxu0 0
      %1288 = vmatmul.mubr.bf16.gmra.mxu0 %v1183
      %v1289 = vpop.f32.mrf.mxu0
      %v1290 = vadd.f32 %v1205, %v1289
      %v1291 = vpop.f32.mrf.mxu0
      %v1292 = vpop.f32.mrf.mxu0
      %v1293 = vpop.f32.mrf.mxu0
      %1294 = vdwg.mxu0
      %1295 = vst [vmem:[#allocation9] sm:$0xff] %v1290
    $region41: #{tpu_custom_call.1} parent=1 // pred_fallthru
      _
    // Predicated region
    $region42: #{tpu_custom_call.1} parent=1 // pred_check
      _
    $region43: #{tpu_custom_call.1} parent=1 // pred_check_branch
      %1297 = sbr.rel (0) target = $region45
    $region44: #{tpu_custom_call.1} parent=1 // pred_region
      %s1299 = ssub.s32 128, 128
      %1300 = vsyncadd [#allocation5], %s1299
      %s1302 = sshll.u32 [#allocation9], 4
      %s1303 = int_to_ptr.vmem [resolvable:$true] %s1302
      %1305 = dma.vmem_to_hbm [thread:$0]  %s1303, 128, %s5, [#allocation5]
    $region45: #{tpu_custom_call.1} parent=1 // pred_fallthru
      _
    // Predicated region
    $region46: #{tpu_custom_call.1} parent=1 // pred_check
      _
    $region47: #{tpu_custom_call.1} parent=1 // pred_check_branch
      %1307 = sbr.rel (0) target = $region49
    $region48: #{tpu_custom_call.1} parent=1 // pred_region
      %1308 = dma.done [#allocation5], 128
    $region49: #{tpu_custom_call.1} parent=1 // pred_fallthru
      _
    %1309 = vsyncpa [#allocation4], 1
    %1310 = vsyncpa [#allocation7], 1
    %1311 = vsyncpa [#allocation5], 1

</llo_original>
